<compile_context>
chip_gen: v5e
topology: v5e:2x2
jax: 0.10.0
libtpu: 0.0.40
codegen_flags: <defaults>
</compile_context>

<pallas_src>
import functools

import jax
import jax.numpy as jnp
from jax import lax
from jax.experimental import pallas as pl
from jax.experimental.pallas import tpu as pltpu


# ----------------------------------------------------------------------------
# Fused matmul kernel:  y = act((X @ W) * scale + shift + sum(residuals))
# ----------------------------------------------------------------------------
def _mm_kernel(*refs, act, n_res):
    x_ref, w_ref, s_ref, b_ref = refs[0], refs[1], refs[2], refs[3]
    res_refs = refs[4:4 + n_res]
    o_ref = refs[4 + n_res]
    acc_ref = refs[5 + n_res]
    k = pl.program_id(2)

    @pl.when(k == 0)
    def _init():
        acc_ref[...] = jnp.zeros_like(acc_ref)

    acc_ref[...] += jnp.dot(x_ref[...], w_ref[...],
                            preferred_element_type=jnp.float32)

    @pl.when(k == pl.num_programs(2) - 1)
    def _finish():
        y = acc_ref[...] * s_ref[...] + b_ref[...]
        for r in res_refs:
            y = y + r[...].astype(jnp.float32)
        if act == "relu":
            y = jnp.maximum(y, 0.0)
        elif act == "sigmoid":
            y = jax.nn.sigmoid(y)
        o_ref[...] = y.astype(o_ref.dtype)


def _pick_divisor(n, cands):
    for c in cands:
        if c <= n and n % c == 0:
            return c
    return None


def fused_matmul(x2d, w2d, scale, shift, act="none", residuals=(),
                 out_dtype=jnp.bfloat16):
    """y = act((x2d @ w2d) * scale + shift + sum(residuals)); x2d [M,K], w2d [K,N]."""
    M, K = x2d.shape
    K2, N = w2d.shape
    assert K == K2
    residuals = [jnp.asarray(r) for r in residuals]

    x2d = x2d.astype(jnp.bfloat16)
    w2d = w2d.astype(jnp.bfloat16)
    scale = scale.astype(jnp.float32)
    shift = shift.astype(jnp.float32)

    # --- N: pad to a lane-dense multiple of 128 (dense vst, full MXU columns).
    Np = max(128, ((N + 127) // 128) * 128)
    if Np != N:
        w2d = jnp.pad(w2d, ((0, 0), (0, Np - N)))
        scale = jnp.pad(scale, (0, Np - N))
        shift = jnp.pad(shift, (0, Np - N))
        residuals = [jnp.pad(r, ((0, 0), (0, Np - N))) for r in residuals]
    TN = _pick_divisor(Np, (256, 128))

    # --- K: single full block if it fits comfortably, else 128-multiple tiles.
    Kp = K
    if K <= 2048:
        TK = K
    else:
        TK = _pick_divisor(K, (2048, 1024, 768, 512, 384, 256, 128))
        if TK is None:
            TK = 512
            Kp = ((K + TK - 1) // TK) * TK
            x2d = jnp.pad(x2d, ((0, 0), (0, Kp - K)))
            w2d = jnp.pad(w2d, ((0, Kp - K), (0, 0)))

    # --- M: prefer a divisor tile so no padding copy of the im2col matrix.
    TM = _pick_divisor(M, (256, 128, 64, 32, 16, 8))
    Mp = M
    if TM is None:
        TM = 256
        Mp = ((M + TM - 1) // TM) * TM
        x2d = jnp.pad(x2d, ((0, Mp - M), (0, 0)))
        residuals = [jnp.pad(r, ((0, Mp - M), (0, 0))) for r in residuals]

    residuals = [r.astype(jnp.bfloat16) for r in residuals]
    n_res = len(residuals)
    s2 = scale.reshape(1, Np)
    b2 = shift.reshape(1, Np)

    grid = (Mp // TM, Np // TN, Kp // TK)
    in_specs = [
        pl.BlockSpec((TM, TK), lambda i, j, k: (i, k)),
        pl.BlockSpec((TK, TN), lambda i, j, k: (k, j)),
        pl.BlockSpec((1, TN), lambda i, j, k: (0, j)),
        pl.BlockSpec((1, TN), lambda i, j, k: (0, j)),
    ] + [pl.BlockSpec((TM, TN), lambda i, j, k: (i, j)) for _ in range(n_res)]

    out = pl.pallas_call(
        functools.partial(_mm_kernel, act=act, n_res=n_res),
        out_shape=jax.ShapeDtypeStruct((Mp, Np), out_dtype),
        grid_spec=pltpu.PrefetchScalarGridSpec(
            num_scalar_prefetch=0,
            grid=grid,
            in_specs=in_specs,
            out_specs=pl.BlockSpec((TM, TN), lambda i, j, k: (i, j)),
            scratch_shapes=[pltpu.VMEM((TM, TN), jnp.float32)]),
        compiler_params=pltpu.CompilerParams(
            dimension_semantics=("parallel", "parallel", "arbitrary")),
    )(x2d, w2d, s2, b2, *residuals)

    if Mp != M or Np != N:
        out = out[:M, :N]
    return out


# ----------------------------------------------------------------------------
# Conv / pool glue
# ----------------------------------------------------------------------------
def _fold_bn_bias(bn, bias, cout):
    if bn is not None:
        scale, shift = bn
    else:
        scale = jnp.ones((cout,), jnp.float32)
        shift = jnp.zeros((cout,), jnp.float32)
    if bias is not None:
        shift = shift + scale * bias
    return scale, shift


def im2col(x, ksize, stride, dilation, padding):
    B, D, H, W, C = x.shape
    kd, kh, kw = ksize
    sd, sh, sw = stride
    dd, dh, dw = dilation
    pd, ph, pw = padding
    xp = jnp.pad(x, ((0, 0), (pd, pd), (ph, ph), (pw, pw), (0, 0)))
    Do = (D + 2 * pd - dd * (kd - 1) - 1) // sd + 1
    Ho = (H + 2 * ph - dh * (kh - 1) - 1) // sh + 1
    Wo = (W + 2 * pw - dw * (kw - 1) - 1) // sw + 1
    cols = []
    for a in range(kd):
        for b in range(kh):
            for c in range(kw):
                patch = xp[:,
                           a * dd: a * dd + sd * (Do - 1) + 1: sd,
                           b * dh: b * dh + sh * (Ho - 1) + 1: sh,
                           c * dw: c * dw + sw * (Wo - 1) + 1: sw, :]
                cols.append(patch)
    return jnp.concatenate(cols, axis=-1), (Do, Ho, Wo)


def conv3d(x, conv, bn=None, act="none", stride=(1, 1, 1), dilation=(1, 1, 1),
           padding=(0, 0, 0), residuals=(), out_dtype=jnp.bfloat16):
    x = x.astype(jnp.bfloat16)
    w = conv["w"]
    kd, kh, kw, cin, cout = w.shape
    cols, (Do, Ho, Wo) = im2col(x, (kd, kh, kw), stride, dilation, padding)
    B = x.shape[0]
    M = B * Do * Ho * Wo
    x2d = cols.reshape(M, kd * kh * kw * cin)
    w2d = w.reshape(kd * kh * kw * cin, cout)
    scale, shift = _fold_bn_bias(bn, conv["b"], cout)
    res2d = [r.reshape(M, cout) for r in residuals]
    y2d = fused_matmul(x2d, w2d, scale, shift, act, res2d, out_dtype)
    return y2d.reshape(B, Do, Ho, Wo, cout)


def conv_transpose3d(x, conv, bn=None, act="none", out_dtype=jnp.bfloat16):
    """ConvTranspose3d(k=3, stride=2, padding=1, output_padding=1) via an 8-way
    sub-pixel decomposition (no zero-stuffed input, no multiply-by-zero MACs).
    # TODO(synk): weights use the zero-dilated-conv "equivalent" layout; real
    # PyTorch checkpoints would need a flip + in/out channel swap re-layout.
    """
    x = x.astype(jnp.bfloat16)
    B, D, H, W, C = x.shape
    w = conv["w"]                      # [3, 3, 3, Cin, Cout]
    cout = w.shape[-1]
    scale, shift = _fold_bn_bias(bn, conv["b"], cout)
    xp = jnp.pad(x, ((0, 0), (0, 1), (0, 1), (0, 1), (0, 0)))
    # parity -> [(kernel tap, input shift)]
    taps = {0: [(1, 0)], 1: [(0, 0), (2, 1)]}
    ys = []
    for pd in (0, 1):
        for ph in (0, 1):
            for pw in (0, 1):
                cols, wsub = [], []
                for kd, sd in taps[pd]:
                    for kh, sh in taps[ph]:
                        for kw_, sw in taps[pw]:
                            cols.append(xp[:, sd:sd + D, sh:sh + H, sw:sw + W, :])
                            wsub.append(w[kd, kh, kw_].reshape(C, cout))
                x2d = jnp.concatenate(cols, axis=-1).reshape(B * D * H * W, -1)
                w2d = jnp.concatenate(wsub, axis=0)
                y2d = fused_matmul(x2d, w2d, scale, shift, act,
                                   out_dtype=out_dtype)
                ys.append(y2d.reshape(B, D, H, W, cout))
    ystack = jnp.stack(ys, 0).reshape(2, 2, 2, B, D, H, W, cout)
    out = jnp.transpose(ystack, (3, 4, 0, 5, 1, 6, 2, 7))
    return out.reshape(B, 2 * D, 2 * H, 2 * W, cout)


def avg_pool3d(x, ksize, stride, padding=(0, 0, 0)):
    # PyTorch AvgPool3d default: count_include_pad=True -> divide by full kernel
    window = (1,) + tuple(ksize) + (1,)
    strides = (1,) + tuple(stride) + (1,)
    pads = ((0, 0),) + tuple((p, p) for p in padding) + ((0, 0),)
    summed = lax.reduce_window(x.astype(jnp.float32), 0.0, lax.add,
                               window, strides, pads)
    return (summed / float(ksize[0] * ksize[1] * ksize[2])).astype(x.dtype)


# ----------------------------------------------------------------------------
# Deterministic synthetic parameters
# ----------------------------------------------------------------------------
class ParamGen:
    def __init__(self, seed=0):
        self._key = jax.random.PRNGKey(seed)

    def normal(self, shape, scale=1.0):
        self._key, sub = jax.random.split(self._key)
        return scale * jax.random.normal(sub, shape, dtype=jnp.float32)


def make_conv(pg, cin, cout, k, bias=False):
    fan_in = float(cin * k[0] * k[1] * k[2])
    w = pg.normal((k[0], k[1], k[2], cin, cout), scale=1.0 / (fan_in ** 0.5))
    b = pg.normal((cout,), scale=0.05) if bias else None
    return {"w": w.astype(jnp.bfloat16), "b": b}   # weights pre-cast to bf16


def make_bn(pg, c, eps=1e-5):
    gamma = 1.0 + pg.normal((c,), 0.1)
    beta = pg.normal((c,), 0.1)
    mean = pg.normal((c,), 0.1)
    var = 1.0 + jnp.abs(pg.normal((c,), 0.1))
    scale = gamma / jnp.sqrt(var + eps)
    shift = beta - mean * scale
    return (scale, shift)


# ----------------------------------------------------------------------------
# Modules
# ----------------------------------------------------------------------------
def make_channel_attention(pg, c):
    return {"conv": make_conv(pg, c, c, (1, 1, 1), bias=True)}


def channel_attention_apply(x, p):
    # AdaptiveAvgPool3d(1) -> Conv3d 1x1 (+bias) -> Sigmoid -> multiply.
    # M == batch (tiny) -> plain XLA dot instead of the Pallas matmul.
    B, D, H, W, C = x.shape
    pooled = jnp.mean(x.astype(jnp.float32), axis=(1, 2, 3))          # [B, C]
    w2d = p["conv"]["w"].reshape(C, C).astype(jnp.float32)
    attn = jax.nn.sigmoid(pooled @ w2d + p["conv"]["b"][None, :])
    return x * attn[:, None, None, None, :].astype(x.dtype)


def make_bottleneck(pg, inplanes, planes, stride=1, dilation=(1, 1, 1),
                    expansion=4, with_downsample=False, downsample_out=None):
    p = {
        "stride": stride, "dilation": dilation, "has_downsample": with_downsample,
        "conv1": make_conv(pg, inplanes, planes, (1, 1, 1)), "bn1": make_bn(pg, planes),
        "conv2": make_conv(pg, planes, planes, (1, 1, 3)), "bn2": make_bn(pg, planes),
        "conv3": make_conv(pg, planes, planes, (1, 3, 1)), "bn3": make_bn(pg, planes),
        "conv4": make_conv(pg, planes, planes, (3, 1, 1)), "bn4": make_bn(pg, planes),
        "conv5": make_conv(pg, planes, planes * expansion, (1, 1, 1)),
        "bn5": make_bn(pg, planes * expansion),
    }
    if stride != 1:
        for name in ("ds2", "ds3", "ds4"):
            p[name + "_conv"] = make_conv(pg, planes, planes, (1, 1, 1))
            p[name + "_bn"] = make_bn(pg, planes)
    if with_downsample:
        p["ds_conv"] = make_conv(pg, inplanes, downsample_out, (1, 1, 1))
        p["ds_bn"] = make_bn(pg, downsample_out)
    return p


def bottleneck_forward(p, x):
    s = p["stride"]
    d = p["dilation"]
    out1 = conv3d(x, p["conv1"], p["bn1"], "relu")
    out2 = conv3d(out1, p["conv2"], p["bn2"], "none",
                  stride=(1, 1, s), dilation=(1, 1, d[0]), padding=(0, 0, d[0]))
    out2_relu = jnp.maximum(out2, 0.0)
    if s != 1:
        out2 = conv3d(avg_pool3d(out2, (1, s, 1), (1, s, 1)),
                      p["ds2_conv"], p["ds2_bn"], "none")
    # out3 = bn3(conv3(out2_relu)) + out2   (residual add fused in the kernel)
    out3 = conv3d(out2_relu, p["conv3"], p["bn3"], "none",
                  stride=(1, s, 1), dilation=(1, d[1], 1), padding=(0, d[1], 0),
                  residuals=[out2])
    out3_relu = jnp.maximum(out3, 0.0)
    if s != 1:
        out2 = conv3d(avg_pool3d(out2, (s, 1, 1), (s, 1, 1)),
                      p["ds3_conv"], p["ds3_bn"], "none")
        out3_add = conv3d(avg_pool3d(out3, (s, 1, 1), (s, 1, 1)),
                          p["ds4_conv"], p["ds4_bn"], "none")
    else:
        out3_add = out3
    # out4 = relu(bn4(conv4(out3_relu)) + out2 + out3)   (adds + ReLU fused)
    out4_relu = conv3d(out3_relu, p["conv4"], p["bn4"], "relu",
                       stride=(s, 1, 1), dilation=(d[2], 1, 1), padding=(d[2], 0, 0),
                       residuals=[out2, out3_add])
    residual = x
    if p["has_downsample"]:
        residual = conv3d(avg_pool3d(x, (2, 2, 2), (2, 2, 2)),
                          p["ds_conv"], p["ds_bn"], "none")
    # out = relu(bn5(conv5(out4_relu)) + residual)        (add + ReLU fused)
    return conv3d(out4_relu, p["conv5"], p["bn5"], "relu", residuals=[residual])


def make_oper(pg, cin, feature):
    return {
        "c1": make_conv(pg, cin, 3, (3, 3, 3)), "b1": make_bn(pg, 3),
        "c2": make_conv(pg, 3, 64, (3, 3, 3)), "b2": make_bn(pg, 64),
        "c3": make_conv(pg, 64, feature, (3, 3, 3)), "b3": make_bn(pg, feature),
    }


def oper_apply(x, p):
    x = conv3d(x, p["c1"], p["b1"], "relu", padding=(1, 1, 1))
    x = conv3d(x, p["c2"], p["b2"], "relu", padding=(1, 1, 1))
    x = conv3d(x, p["c3"], p["b3"], "relu", padding=(1, 1, 1))
    return x


def make_semantic_layers(pg, feature):
    sem1 = [
        make_bottleneck(pg, feature, feature // 4, stride=2, expansion=4,
                        with_downsample=True, downsample_out=feature),
        make_bottleneck(pg, feature, feature // 4, dilation=(1, 1, 1)),
        make_bottleneck(pg, feature, feature // 4, dilation=(2, 2, 2)),
        make_bottleneck(pg, feature, feature // 4, dilation=(3, 3, 3)),
    ]
    sem2 = [
        make_bottleneck(pg, feature, feature // 4, stride=2, expansion=8,
                        with_downsample=True, downsample_out=feature * 2),
        make_bottleneck(pg, feature * 2, feature // 2, dilation=(1, 1, 1)),
        make_bottleneck(pg, feature * 2, feature // 2, dilation=(2, 2, 2)),
        make_bottleneck(pg, feature * 2, feature // 2, dilation=(3, 3, 3)),
    ]
    return sem1, sem2


def make_stage12(pg, cin, feature):
    sem1, sem2 = make_semantic_layers(pg, feature)
    return {"oper": make_oper(pg, cin, feature), "sem1": sem1, "sem2": sem2}


def make_stage3(pg, feature, class_num):
    return {
        "rgb_acm_1": make_channel_attention(pg, feature),
        "tsdf_acm_1": make_channel_attention(pg, feature),
        "rgb_acm_2": make_channel_attention(pg, feature * 2),
        "tsdf_acm_2": make_channel_attention(pg, feature * 2),
        "pool_middle": {
            "conv": make_conv(pg, feature, feature * 2, (1, 1, 1), bias=True),
            "bn": make_bn(pg, feature * 2),
        },
        "cls0_conv": make_conv(pg, feature * 2, feature, (3, 3, 3), bias=True),
        "cls0_bn": make_bn(pg, feature),
        "cls1_conv": make_conv(pg, feature, feature, (3, 3, 3), bias=True),
        "cls1_bn": make_bn(pg, feature),
        "cls2_conv": make_conv(pg, feature, class_num, (1, 1, 1), bias=True),
        "conv1": make_conv(pg, feature, feature, (3, 3, 3)),
        "conv1_bn": make_bn(pg, feature),
        "final_conv": make_conv(pg, feature, feature, (3, 3, 3)),
        "final_bn": make_bn(pg, feature),
    }


def stage1_forward(p, rgb):
    seg_fea = oper_apply(rgb, p["oper"])
    x = seg_fea
    for bp in p["sem1"]:
        x = bottleneck_forward(bp, x)
    semantic1 = x
    for bp in p["sem2"]:
        x = bottleneck_forward(bp, x)
    return semantic1, x


def stage2_forward(p, tsdf):
    seg_fea = oper_apply(tsdf, p["oper"])
    x = seg_fea
    for bp in p["sem1"]:
        x = bottleneck_forward(bp, x)
    # TODO(synk): reference hardcodes F.interpolate(size=[30,18,30]) for the
    # 60x36x60 NYU volume; generalized to nearest-downsample-by-2 (::2), which
    # is exactly what that interpolation computes at the original resolution.
    semantic1 = x + seg_fea[:, ::2, ::2, ::2, :]
    y = semantic1
    for bp in p["sem2"]:
        y = bottleneck_forward(bp, y)
    return semantic1, y


def pool_middle_apply(x, p):
    y = conv3d(x, p["conv"], bn=None, act="none")          # 1x1x1 conv + bias
    y = avg_pool3d(y, (3, 3, 3), (2, 2, 2), (1, 1, 1))     # AvgPool3d(3, p=1, s=2)
    scale, shift = p["bn"]
    return (y.astype(jnp.float32) * scale + shift).astype(y.dtype)


def stage3_forward(p, rgbs, tsdfs):
    rgb1, rgb2 = rgbs
    tsdf1, tsdf2 = tsdfs
    fuse1 = (channel_attention_apply(rgb1, p["rgb_acm_1"])
             + channel_attention_apply(tsdf1, p["tsdf_acm_1"]))
    middle_down = pool_middle_apply(fuse1, p["pool_middle"])
    fuse2 = (channel_attention_apply(rgb2, p["rgb_acm_2"])
             + channel_attention_apply(tsdf2, p["tsdf_acm_2"])
             + middle_down)
    pred = (conv_transpose3d(fuse2, p["cls0_conv"], p["cls0_bn"], "relu")
            + conv3d(fuse1, p["conv1"], p["conv1_bn"], "relu", padding=(1, 1, 1)))
    pred = conv_transpose3d(pred, p["cls1_conv"], p["cls1_bn"], "relu")
    pred = conv3d(pred, p["final_conv"], p["final_bn"], "relu", padding=(1, 1, 1))
    # Dropout3d(0.1) is identity at inference
    pred = conv3d(pred, p["cls2_conv"], bn=None, act="none",
                  out_dtype=jnp.float32)
    return pred


def network_forward(params, img, depth_mapping_3d, tsdf, sketch_gt, seg_2d):
    # img, depth_mapping_3d, sketch_gt are unused in the reference forward.
    seg_2d = jnp.transpose(seg_2d, (0, 2, 3, 4, 1))  # NCDHW -> NDHWC
    tsdf = jnp.transpose(tsdf, (0, 2, 3, 4, 1))
    rgb1, rgb2 = stage1_forward(params["stage1"], seg_2d)
    t1, t2 = stage2_forward(params["stage2"], tsdf)
    pred = stage3_forward(params["stage3"], (rgb1, rgb2), (t1, t2))
    pred = jnp.transpose(pred, (0, 4, 1, 2, 3))      # back to NCDHW
    return {"pred_semantic": pred}


if __name__ == "__main__":
    feature = 32       # reference default 512; scaled down for the test
    class_num = 12
    B, D, H, W = 2, 8, 8, 8

    pg = ParamGen(0)
    params = {
        "stage1": make_stage12(pg, 12, feature),   # seg_2d has 12 channels
        "stage2": make_stage12(pg, 1, feature),    # tsdf has 1 channel
        "stage3": make_stage3(pg, feature, class_num),
    }

    key = jax.random.PRNGKey(0)
    k1, k2, k3, k4, k5 = jax.random.split(key, 5)
    seg_2d = jax.random.normal(k1, (B, 12, D, H, W), jnp.float32)
    tsdf = jax.random.normal(k2, (B, 1, D, H, W), jnp.float32)
    img = jax.random.normal(k3, (B, 3, 16, 16), jnp.float32)                 # unused
    depth_mapping_3d = jax.random.normal(k4, (B, D * H * W), jnp.float32)    # unused
    sketch_gt = jax.random.normal(k5, (B, 1, D, H, W), jnp.float32)          # unused

    out = network_forward(params, img, depth_mapping_3d, tsdf, sketch_gt, seg_2d)
    pred = jax.block_until_ready(out["pred_semantic"])
    assert pred.shape == (B, class_num, D, H, W), pred.shape
    assert jnp.all(jnp.isfinite(pred))
    print("KERNEL_OK")
</pallas_src>

<mosaic_0001>
module attributes {stable_mosaic.version = 11 : i64} {
  func.func @_mm_kernel(%arg0: i32, %arg1: i32, %arg2: i32, %arg3: memref<256x324xbf16, #tpu.memory_space<vmem>>, %arg4: memref<324x128xbf16, #tpu.memory_space<vmem>>, %arg5: memref<1x128xf32, #tpu.memory_space<vmem>>, %arg6: memref<1x128xf32, #tpu.memory_space<vmem>>, %arg7: memref<256x128xbf16, #tpu.memory_space<vmem>>, %arg8: memref<256x128xf32, #tpu.memory_space<vmem>>) attributes {dimension_semantics = [#tpu.dimension_semantics<parallel>, #tpu.dimension_semantics<parallel>, #tpu.dimension_semantics<arbitrary>], iteration_bounds = array<i64: 4, 1, 1>, scalar_prefetch = 0 : i64, scratch_operands = 1 : i64, tpu.core_type = #tpu.core_type<tc>, window_params = [{transform_indices = @transform_0, window_bounds = array<i64: 256, 324>}, {transform_indices = @transform_1, window_bounds = array<i64: 324, 128>}, {transform_indices = @transform_2, window_bounds = array<i64: 1, 128>}, {transform_indices = @transform_3, window_bounds = array<i64: 1, 128>}, {transform_indices = @transform_4, window_bounds = array<i64: 256, 128>}]} {
    %c0_i32 = arith.constant 0 : i32
    %0 = arith.cmpi eq, %arg2, %c0_i32 : i32
    %1 = arith.extui %0 : i1 to i32
    %c0_i32_0 = arith.constant 0 : i32
    %2 = arith.cmpi ne, %1, %c0_i32_0 : i32
    scf.if %2 {
      %cst_10 = arith.constant 0.000000e+00 : f32
      %12 = vector.broadcast %cst_10 : f32 to vector<256x128xf32>
      %c0_11 = arith.constant 0 : index
      %c0_12 = arith.constant 0 : index
      %13 = vector.load %arg8[%c0_11, %c0_12] : memref<256x128xf32, #tpu.memory_space<vmem>>, vector<256x128xf32>
      tpu.vector_store %arg8[%c0_11, %c0_12], %12 {strides = array<i32>} : memref<256x128xf32, #tpu.memory_space<vmem>>, vector<256x128xf32>,
    } else {
    }
    %c0 = arith.constant 0 : index
    %c0_1 = arith.constant 0 : index
    %3 = vector.load %arg8[%c0, %c0_1] : memref<256x128xf32, #tpu.memory_space<vmem>>, vector<256x128xf32>
    %c0_2 = arith.constant 0 : index
    %c0_3 = arith.constant 0 : index
    %4 = vector.load %arg3[%c0_2, %c0_3] : memref<256x324xbf16, #tpu.memory_space<vmem>>, vector<256x324xbf16>
    %c0_4 = arith.constant 0 : index
    %c0_5 = arith.constant 0 : index
    %5 = vector.load %arg4[%c0_4, %c0_5] : memref<324x128xbf16, #tpu.memory_space<vmem>>, vector<324x128xbf16>
    %cst = arith.constant dense<0.000000e+00> : vector<256x128xf32>
    %6 = tpu.matmul %4, %5, %cst {dimension_numbers = #tpu.dot_dimension_numbers<[1], [0], [0], [1], [0, 0, 1, 1], [], []>} : vector<256x324xbf16>, vector<324x128xbf16>, vector<256x128xf32> -> vector<256x128xf32>
    %7 = arith.addf %3, %6 : vector<256x128xf32>
    %c0_6 = arith.constant 0 : index
    %c0_7 = arith.constant 0 : index
    %8 = vector.load %arg8[%c0_6, %c0_7] : memref<256x128xf32, #tpu.memory_space<vmem>>, vector<256x128xf32>
    tpu.vector_store %arg8[%c0_6, %c0_7], %7 {strides = array<i32>} : memref<256x128xf32, #tpu.memory_space<vmem>>, vector<256x128xf32>,
    %c0_i32_8 = arith.constant 0 : i32
    %9 = arith.cmpi eq, %arg2, %c0_i32_8 : i32
    %10 = arith.extui %9 : i1 to i32
    %c0_i32_9 = arith.constant 0 : i32
    %11 = arith.cmpi ne, %10, %c0_i32_9 : i32
    scf.if %11 {
      %c0_10 = arith.constant 0 : index
      %c0_11 = arith.constant 0 : index
      %12 = vector.load %arg8[%c0_10, %c0_11] : memref<256x128xf32, #tpu.memory_space<vmem>>, vector<256x128xf32>
      %c0_12 = arith.constant 0 : index
      %c0_13 = arith.constant 0 : index
      %13 = vector.load %arg5[%c0_12, %c0_13] : memref<1x128xf32, #tpu.memory_space<vmem>>, vector<1x128xf32>
      %14 = vector.broadcast %13 : vector<1x128xf32> to vector<256x128xf32>
      %15 = arith.mulf %12, %14 : vector<256x128xf32>
      %c0_14 = arith.constant 0 : index
      %c0_15 = arith.constant 0 : index
      %16 = vector.load %arg6[%c0_14, %c0_15] : memref<1x128xf32, #tpu.memory_space<vmem>>, vector<1x128xf32>
      %17 = vector.broadcast %16 : vector<1x128xf32> to vector<256x128xf32>
      %18 = arith.addf %15, %17 : vector<256x128xf32>
      %cst_16 = arith.constant 0.000000e+00 : f32
      %19 = vector.broadcast %cst_16 : f32 to vector<256x128xf32>
      %20 = arith.maximumf %18, %19 : vector<256x128xf32>
      %21 = arith.truncf %20 : vector<256x128xf32> to vector<256x128xbf16>
      %c0_17 = arith.constant 0 : index
      %c0_18 = arith.constant 0 : index
      %22 = vector.load %arg7[%c0_17, %c0_18] : memref<256x128xbf16, #tpu.memory_space<vmem>>, vector<256x128xbf16>
      tpu.vector_store %arg7[%c0_17, %c0_18], %21 {strides = array<i32>} : memref<256x128xbf16, #tpu.memory_space<vmem>>, vector<256x128xbf16>,
    } else {
    }
    return
  }
  func.func @transform_0(%arg0: i32, %arg1: i32, %arg2: i32) -> (i32, i32) {
    %c0_i32 = arith.constant 0 : i32
    return %arg0, %arg2 : i32, i32
  }
  func.func @transform_1(%arg0: i32, %arg1: i32, %arg2: i32) -> (i32, i32) {
    %c0_i32 = arith.constant 0 : i32
    return %arg2, %arg1 : i32, i32
  }
  func.func @transform_2(%arg0: i32, %arg1: i32, %arg2: i32) -> (i32, i32) {
    %c0_i32 = arith.constant 0 : i32
    %c0_i32_0 = arith.constant 0 : i32
    return %c0_i32, %arg1 : i32, i32
  }
  func.func @transform_3(%arg0: i32, %arg1: i32, %arg2: i32) -> (i32, i32) {
    %c0_i32 = arith.constant 0 : i32
    %c0_i32_0 = arith.constant 0 : i32
    return %c0_i32, %arg1 : i32, i32
  }
  func.func @transform_4(%arg0: i32, %arg1: i32, %arg2: i32) -> (i32, i32) {
    %c0_i32 = arith.constant 0 : i32
    return %arg0, %arg1 : i32, i32
  }
}

</mosaic_0001>

<llo_original>
// kernel: tpu_custom_call.1
$region0: #{tpu_custom_call.1}
  #allocation0 [shape = 'u32[]', space=smem, size = 0x4, offset = 0x4, fixed_abs, tag = 'smem constant byte address 0x4 - core index']
  #allocation1 [shape = 'u32[72,128]{1,0:T(1,128)}', space=vmem, size = 0x9000, scoped, tag = 'internal scratch']
  #allocation2 [shape = 'f32[256,128]{1,0:T(8,128)}', space=vmem, size = 0x20000, scoped, tag = 'scratch operand']
  %s0 = inlined_call_operand.vmem [shape: bf16[1024,324], index: 0, kind: input, shape index: {}]
  %s1 = inlined_call_operand.vmem [shape: bf16[324,128], index: 1, kind: input, shape index: {}]
  %s2 = inlined_call_operand.vmem [shape: f32[1,128], index: 2, kind: input, shape index: {}]
  %s3 = inlined_call_operand.vmem [shape: f32[1,128], index: 3, kind: input, shape index: {}]
  %s4 = inlined_call_operand.hbm [shape: bf16[1024,128], index: 4, kind: output, shape index: {}]
  %s5 = sld [smem:[#allocation0]]
  $region57: #{tpu_custom_call.1} parent=0
    _
  %s7 = ssub.s32 1, %s5
  %s8 = scalar_select 0, %s7, %s5
  $region1: #{tpu_custom_call.1} parent=0
    #allocation3 [shape = 'u8[131072]{0}', space=vmem, size = 0x20000, scoped, tag = 'output window, operand 0']
    #allocation4 [shape = 's32[2]{0}', space=sflag, size = 0x8, scoped, tag = 'scoped memory for tpu_custom_call.1']
    %9 = vsyncpa [#allocation4], 0
    %s10 = scalar_lea.sflag [#allocation4], 1
    %11 = vsyncpa %s10, 0
    loop: start=0, step=1, limit=6
    $region2: #{tpu_custom_call.1} parent=1 // loop_pre_header
      _
    $region3: #{tpu_custom_call.1} parent=1 // loop_header
      %s13 = sphi 0, %s17
      %p14 = scmp.ge.s32.totalorder %s13, 6
      %s20 = sphi 0, %s39
      %s21 = sphi 0, %s35
      %s22 = sphi 0, %s31
      %s23 = sphi 0, %s20
      %s24 = sphi 0, %s21
      %s25 = sphi 0, %s22
      %s26 = sphi 0, %s23
      %s27 = sphi 0, %s24
      %s28 = sphi 0, %s25
      %s44 = sphi 0, %s46
      %s47 = sphi 0, %s44
      %s48 = sphi 0, %s47
      %s64 = sphi 0, %s48
      %s72 = sphi 0, %s74
      %s75 = sphi 0, %s72
      %s76 = sphi 0, %s75
      %s92 = sphi 0, %s76
      %s98 = sphi 0, %s100
      %s101 = sphi 0, %s98
      %s102 = sphi 0, %s101
      %s118 = sphi 0, %s102
      %s124 = sphi 0, %s126
      %s127 = sphi 0, %s124
      %s128 = sphi 0, %s127
      %s144 = sphi 0, %s128
      %s152 = sphi 0, %s154
      %s155 = sphi 0, %s152
      %s156 = sphi 0, %s155
      %s172 = sphi 0, %s156
    $region4: #{tpu_custom_call.1} parent=1 // loop_header_branch
      %16 = sbr.rel (%p14) target = $region8
    $region5: #{tpu_custom_call.1} parent=1 // loop_body
      %s18 = ssub.s32 %s13, 1
      %s19 = ssub.s32 %s13, 2
      %s29 = sadd.s32 1, %s22
      %p30 = scmp.ge.s32.totalorder %s29, 1
      %s31 = scalar_select %p30, 0, %s29
      %s32 = sadd.s32 1, %s21
      %s33 = scalar_select %p30, %s32, %s21
      %p34 = scmp.ge.s32.totalorder %s33, 1
      %s35 = scalar_select %p34, 0, %s33
      %s36 = sadd.s32 1, %s20
      %s37 = scalar_select %p34, %s36, %s20
      %p38 = scmp.ge.s32.totalorder %s37, 4
      %s39 = scalar_select %p38, 0, %s37
      %s40 = ssub.s32 %s20, %s39
      %s41 = ssub.s32 %s22, %s31
      %s42 = sor.u32 %s40, %s41
      %p43 = scmp.eq.s32.totalorder %s42, 0
      %s45 = sadd.s32 %s44, 1
      %s46 = scalar_select %p43, %s44, %s45
      %p49 = pneg %p43
      %p50 = scmp.eq.s32.totalorder %s13, 3
      %p51 = por %p49, %p50
      %p52 = scmp.ne.s32.totalorder %s44, %s47
      %p53 = scmp.eq.s32.totalorder %s13, 0
      %p54 = por %p52, %p53
      %p55 = scmp.ne.s32.totalorder %s44, %s47
      %p56 = scmp.eq.s32.totalorder %s18, 3
      %p57 = por %p55, %p56
      %p58 = scmp.ne.s32.totalorder %s47, %s48
      %p59 = scmp.eq.s32.totalorder %s18, 0
      %p60 = por %p58, %p59
      %p61 = scmp.ne.s32.totalorder %s47, %s48
      %p62 = scmp.eq.s32.totalorder %s19, 3
      %p63 = por %p61, %p62
      %p65 = scmp.ne.s32.totalorder %s48, %s64
      %p66 = scmp.eq.s32.totalorder %s19, 0
      %p67 = por %p65, %p66
      %s68 = ssub.s32 %s22, %s31
      %s69 = ssub.s32 %s21, %s35
      %s70 = sor.u32 %s68, %s69
      %p71 = scmp.eq.s32.totalorder %s70, 0
      %s73 = sadd.s32 %s72, 1
      %s74 = scalar_select %p71, %s72, %s73
      %p77 = pneg %p71
      %p78 = scmp.eq.s32.totalorder %s13, 3
      %p79 = por %p77, %p78
      %p80 = scmp.ne.s32.totalorder %s72, %s75
      %p81 = scmp.eq.s32.totalorder %s13, 0
      %p82 = por %p80, %p81
      %p83 = scmp.ne.s32.totalorder %s72, %s75
      %p84 = scmp.eq.s32.totalorder %s18, 3
      %p85 = por %p83, %p84
      %p86 = scmp.ne.s32.totalorder %s75, %s76
      %p87 = scmp.eq.s32.totalorder %s18, 0
      %p88 = por %p86, %p87
      %p89 = scmp.ne.s32.totalorder %s75, %s76
      %p90 = scmp.eq.s32.totalorder %s19, 3
      %p91 = por %p89, %p90
      %p93 = scmp.ne.s32.totalorder %s76, %s92
      %p94 = scmp.eq.s32.totalorder %s19, 0
      %p95 = por %p93, %p94
      %s96 = ssub.s32 %s21, %s35
      %p97 = scmp.eq.s32.totalorder %s96, 0
      %s99 = sadd.s32 %s98, 1
      %s100 = scalar_select %p97, %s98, %s99
      %p103 = pneg %p97
      %p104 = scmp.eq.s32.totalorder %s13, 3
      %p105 = por %p103, %p104
      %p106 = scmp.ne.s32.totalorder %s98, %s101
      %p107 = scmp.eq.s32.totalorder %s13, 0
      %p108 = por %p106, %p107
      %p109 = scmp.ne.s32.totalorder %s98, %s101
      %p110 = scmp.eq.s32.totalorder %s18, 3
      %p111 = por %p109, %p110
      %p112 = scmp.ne.s32.totalorder %s101, %s102
      %p113 = scmp.eq.s32.totalorder %s18, 0
      %p114 = por %p112, %p113
      %p115 = scmp.ne.s32.totalorder %s101, %s102
      %p116 = scmp.eq.s32.totalorder %s19, 3
      %p117 = por %p115, %p116
      %p119 = scmp.ne.s32.totalorder %s102, %s118
      %p120 = scmp.eq.s32.totalorder %s19, 0
      %p121 = por %p119, %p120
      %s122 = ssub.s32 %s21, %s35
      %p123 = scmp.eq.s32.totalorder %s122, 0
      %s125 = sadd.s32 %s124, 1
      %s126 = scalar_select %p123, %s124, %s125
      %p129 = pneg %p123
      %p130 = scmp.eq.s32.totalorder %s13, 3
      %p131 = por %p129, %p130
      %p132 = scmp.ne.s32.totalorder %s124, %s127
      %p133 = scmp.eq.s32.totalorder %s13, 0
      %p134 = por %p132, %p133
      %p135 = scmp.ne.s32.totalorder %s124, %s127
      %p136 = scmp.eq.s32.totalorder %s18, 3
      %p137 = por %p135, %p136
      %p138 = scmp.ne.s32.totalorder %s127, %s128
      %p139 = scmp.eq.s32.totalorder %s18, 0
      %p140 = por %p138, %p139
      %p141 = scmp.ne.s32.totalorder %s127, %s128
      %p142 = scmp.eq.s32.totalorder %s19, 3
      %p143 = por %p141, %p142
      %p145 = scmp.ne.s32.totalorder %s128, %s144
      %p146 = scmp.eq.s32.totalorder %s19, 0
      %p147 = por %p145, %p146
      %s148 = ssub.s32 %s20, %s39
      %s149 = ssub.s32 %s21, %s35
      %s150 = sor.u32 %s148, %s149
      %p151 = scmp.eq.s32.totalorder %s150, 0
      %s153 = sadd.s32 %s152, 1
      %s154 = scalar_select %p151, %s152, %s153
      %p157 = pneg %p151
      %p158 = scmp.eq.s32.totalorder %s13, 3
      %p159 = por %p157, %p158
      %p160 = scmp.ne.s32.totalorder %s152, %s155
      %p161 = scmp.eq.s32.totalorder %s13, 0
      %p162 = por %p160, %p161
      %p163 = scmp.ne.s32.totalorder %s152, %s155
      %p164 = scmp.eq.s32.totalorder %s18, 3
      %p165 = por %p163, %p164
      %p166 = scmp.ne.s32.totalorder %s155, %s156
      %p167 = scmp.eq.s32.totalorder %s18, 0
      %p168 = por %p166, %p167
      %p169 = scmp.ne.s32.totalorder %s155, %s156
      %p170 = scmp.eq.s32.totalorder %s19, 3
      %p171 = por %p169, %p170
      %p173 = scmp.ne.s32.totalorder %s156, %s172
      %p174 = scmp.eq.s32.totalorder %s19, 0
      %p175 = por %p173, %p174
      %p176 = scmp.le.s32.totalorder 1, %s13
      %p177 = scmp.lt.s32.totalorder %s13, 5
      %p178 = pnand %p176, %p177
      %p179 = pneg %p178
      // Predicated region
      $region9: #{tpu_custom_call.1} parent=5 // pred_check
        _
      $region10: #{tpu_custom_call.1} parent=5 // pred_check_branch
        %181 = sbr.rel (%p178) target = $region12
      $region11: #{tpu_custom_call.1} parent=5 // pred_region
        %s182 = ssub.s32 %s13, 1
        // Predicated region
        $region13: #{tpu_custom_call.1} parent=11 // pred_check
          %p183 = pneg %p88
        $region14: #{tpu_custom_call.1} parent=11 // pred_check_branch
          %185 = sbr.rel (%p183) target = $region16
        $region15: #{tpu_custom_call.1} parent=11 // pred_region
          %s186 = smul.u32 41, %s25
          %p187 = scmp.lt.s32.totalorder %s186, 40
          %s188 = scalar_select %p187, %s186, 40
          %p189 = scmp.lt.s32.totalorder %s24, 0
          %s190 = scalar_select %p189, %s24, 0
          %s191 = sadd.s32 %s190, %s188
          %s192 = smul.addr %s191, 4
          %s193 = scalar_lea.vmem %s1, %s192
          %s194 = smul.u32 41, %s25
        $region16: #{tpu_custom_call.1} parent=11 // pred_fallthru
          _
        // Predicated region
        $region17: #{tpu_custom_call.1} parent=11 // pred_check
          %p195 = pneg %p114
        $region18: #{tpu_custom_call.1} parent=11 // pred_check_branch
          %197 = sbr.rel (%p195) target = $region20
        $region19: #{tpu_custom_call.1} parent=11 // pred_region
          %p198 = scmp.lt.s32.totalorder %s24, 0
          %s199 = scalar_select %p198, %s24, 0
          %s200 = scalar_lea.vmem %s2, %s199
        $region20: #{tpu_custom_call.1} parent=11 // pred_fallthru
          _
        // Predicated region
        $region21: #{tpu_custom_call.1} parent=11 // pred_check
          %p201 = pneg %p140
        $region22: #{tpu_custom_call.1} parent=11 // pred_check_branch
          %203 = sbr.rel (%p201) target = $region24
        $region23: #{tpu_custom_call.1} parent=11 // pred_region
          %p204 = scmp.lt.s32.totalorder %s24, 0
          %s205 = scalar_select %p204, %s24, 0
          %s206 = scalar_lea.vmem %s3, %s205
        $region24: #{tpu_custom_call.1} parent=11 // pred_fallthru
          _
      $region12: #{tpu_custom_call.1} parent=5 // pred_fallthru
        _
      %p207 = scmp.lt.s32.totalorder %s13, 4
      // Predicated region
      $region25: #{tpu_custom_call.1} parent=5 // pred_check
        %p208 = pneg %p207
      $region26: #{tpu_custom_call.1} parent=5 // pred_check_branch
        %210 = sbr.rel (%p208) target = $region28
      $region27: #{tpu_custom_call.1} parent=5 // pred_region
        // Predicated region
        $region29: #{tpu_custom_call.1} parent=27 // pred_check
          %p211 = pneg %p54
        $region30: #{tpu_custom_call.1} parent=27 // pred_check_branch
          %213 = sbr.rel (%p211) target = $region32
        $region31: #{tpu_custom_call.1} parent=27 // pred_region
          %s214 = smul.u32 32, %s20
          %s215 = smul.u32 3, %s22
          %p216 = scmp.lt.s32.totalorder %s214, 127
          %s217 = scalar_select %p216, %s214, 127
          %p218 = scmp.lt.s32.totalorder %s215, 2
          %s219 = scalar_select %p218, %s215, 2
          %s220 = smul.addr %s217, 3
          %s221 = sadd.s32 %s219, %s220
          %s222 = smul.addr %s221, 4
          %s223 = scalar_lea.vmem %s0, %s222
          %s224 = smul.u32 32, %s20
          %s225 = smul.u32 3, %s22
        $region32: #{tpu_custom_call.1} parent=27 // pred_fallthru
          _
      $region28: #{tpu_custom_call.1} parent=5 // pred_fallthru
        _
      %p226 = scmp.le.s32.totalorder 1, %s13
      %p227 = scmp.lt.s32.totalorder %s13, 5
      %p228 = pnand %p226, %p227
      %p229 = pneg %p228
      // Predicated region
      $region33: #{tpu_custom_call.1} parent=5 // pred_check
        _
      $region34: #{tpu_custom_call.1} parent=5 // pred_check_branch
        %231 = sbr.rel (%p228) target = $region36
      $region35: #{tpu_custom_call.1} parent=5 // pred_region
        %s232 = ssub.s32 %s13, 1
        %s233 = smul.u32 32, %s23
        %s234 = smul.u32 3, %s25
        %p235 = scmp.lt.s32.totalorder %s233, 127
        %s236 = scalar_select %p235, %s233, 127
        %p237 = scmp.lt.s32.totalorder %s234, 2
        %s238 = scalar_select %p237, %s234, 2
        %s239 = smul.addr %s236, 3
        %s240 = sadd.s32 %s238, %s239
        %s241 = smul.addr %s240, 4
        %s242 = scalar_lea.vmem %s0, %s241
        %p243 = pneg %p60
        %p244 = pneg %p57
        %s245 = smul.u32 41, %s25
        %p246 = scmp.lt.s32.totalorder %s245, 40
        %s247 = scalar_select %p246, %s245, 40
        %p248 = scmp.lt.s32.totalorder %s24, 0
        %s249 = scalar_select %p248, %s24, 0
        %s250 = sadd.s32 %s249, %s247
        %s251 = smul.addr %s250, 4
        %s252 = scalar_lea.vmem %s1, %s251
        %p253 = pneg %p88
        %p254 = pneg %p85
        %p255 = scmp.lt.s32.totalorder %s24, 0
        %s256 = scalar_select %p255, %s24, 0
        %s257 = scalar_lea.vmem %s2, %s256
        %p258 = pneg %p114
        %p259 = pneg %p111
        %p260 = scmp.lt.s32.totalorder %s24, 0
        %s261 = scalar_select %p260, %s24, 0
        %s262 = scalar_lea.vmem %s3, %s261
        %p263 = pneg %p140
        %p264 = pneg %p137
        %p265 = pneg %p168
        %p266 = pneg %p165
        %s267 = sand.u32 %s155, 1
        %s268 = scalar_lea.sflag [#allocation4], %s267
        %s269 = sand.u32 %s155, 1
        %s270 = smul.addr %s269, 128
        %s271 = scalar_lea.vmem [#allocation3], %s270
        %s272 = smul.u32 32, %s23
        %s273 = smul.u32 3, %s25
        %p274 = scmp.lt.s32.totalorder %s272, 127
        %s275 = scalar_select %p274, %s272, 127
        %p276 = scmp.lt.s32.totalorder %s273, 2
        %s277 = scalar_select %p276, %s273, 2
        %s278 = smul.addr %s275, 3
        %s279 = sadd.s32 %s277, %s278
        %s280 = smul.addr %s279, 4
        %s281 = scalar_lea.vmem %s0, %s280
        %s282 = smul.u32 32, %s23
        %s283 = smul.u32 3, %s25
        %s284 = smul.u32 41, %s25
        %p285 = scmp.lt.s32.totalorder %s284, 40
        %s286 = scalar_select %p285, %s284, 40
        %p287 = scmp.lt.s32.totalorder %s24, 0
        %s288 = scalar_select %p287, %s24, 0
        %s289 = sadd.s32 %s288, %s286
        %s290 = smul.addr %s289, 4
        %s291 = scalar_lea.vmem %s1, %s290
        %s292 = smul.u32 41, %s25
        %p293 = scmp.lt.s32.totalorder %s24, 0
        %s294 = scalar_select %p293, %s24, 0
        %s295 = scalar_lea.vmem %s2, %s294
        %p296 = scmp.lt.s32.totalorder %s24, 0
        %s297 = scalar_select %p296, %s24, 0
        %s298 = scalar_lea.vmem %s3, %s297
        %s299 = smul.u32 32, %s23
        %p301 = scmp.eq.s32.totalorder %s25, 0
        // Predicated region
        $region37: #{tpu_custom_call.1} parent=35 // pred_check
          %p302 = pneg %p301
        $region38: #{tpu_custom_call.1} parent=35 // pred_check_branch
          %304 = sbr.rel (%p302) target = $region40
        $region39: #{tpu_custom_call.1} parent=35 // pred_region
          %305 = vst [vmem:[#allocation2] sm:$0xff] 0.0
          %306 = vst [vmem:[#allocation2 + $0x8] sm:$0xff] 0.0
          %307 = vst [vmem:[#allocation2 + $0x10] sm:$0xff] 0.0
          %308 = vst [vmem:[#allocation2 + $0x18] sm:$0xff] 0.0
          %309 = vst [vmem:[#allocation2 + $0x20] sm:$0xff] 0.0
          %310 = vst [vmem:[#allocation2 + $0x28] sm:$0xff] 0.0
          %311 = vst [vmem:[#allocation2 + $0x30] sm:$0xff] 0.0
          %312 = vst [vmem:[#allocation2 + $0x38] sm:$0xff] 0.0
          %313 = vst [vmem:[#allocation2 + $0x40] sm:$0xff] 0.0
          %314 = vst [vmem:[#allocation2 + $0x48] sm:$0xff] 0.0
          %315 = vst [vmem:[#allocation2 + $0x50] sm:$0xff] 0.0
          %316 = vst [vmem:[#allocation2 + $0x58] sm:$0xff] 0.0
          %317 = vst [vmem:[#allocation2 + $0x60] sm:$0xff] 0.0
          %318 = vst [vmem:[#allocation2 + $0x68] sm:$0xff] 0.0
          %319 = vst [vmem:[#allocation2 + $0x70] sm:$0xff] 0.0
          %320 = vst [vmem:[#allocation2 + $0x78] sm:$0xff] 0.0
          %321 = vst [vmem:[#allocation2 + $0x80] sm:$0xff] 0.0
          %322 = vst [vmem:[#allocation2 + $0x88] sm:$0xff] 0.0
          %323 = vst [vmem:[#allocation2 + $0x90] sm:$0xff] 0.0
          %324 = vst [vmem:[#allocation2 + $0x98] sm:$0xff] 0.0
          %325 = vst [vmem:[#allocation2 + $0xa0] sm:$0xff] 0.0
          %326 = vst [vmem:[#allocation2 + $0xa8] sm:$0xff] 0.0
          %327 = vst [vmem:[#allocation2 + $0xb0] sm:$0xff] 0.0
          %328 = vst [vmem:[#allocation2 + $0xb8] sm:$0xff] 0.0
          %329 = vst [vmem:[#allocation2 + $0xc0] sm:$0xff] 0.0
          %330 = vst [vmem:[#allocation2 + $0xc8] sm:$0xff] 0.0
          %331 = vst [vmem:[#allocation2 + $0xd0] sm:$0xff] 0.0
          %332 = vst [vmem:[#allocation2 + $0xd8] sm:$0xff] 0.0
          %333 = vst [vmem:[#allocation2 + $0xe0] sm:$0xff] 0.0
          %334 = vst [vmem:[#allocation2 + $0xe8] sm:$0xff] 0.0
          %335 = vst [vmem:[#allocation2 + $0xf0] sm:$0xff] 0.0
          %336 = vst [vmem:[#allocation2 + $0xf8] sm:$0xff] 0.0
        $region40: #{tpu_custom_call.1} parent=35 // pred_fallthru
          _
        %v337 = vld [vmem:[#allocation2] sm:$0xff]
        %v338 = vld [vmem:[#allocation2 + $0x8] sm:$0xff]
        %v339 = vld [vmem:[#allocation2 + $0x10] sm:$0xff]
        %v340 = vld [vmem:[#allocation2 + $0x18] sm:$0xff]
        %v341 = vld [vmem:[#allocation2 + $0x20] sm:$0xff]
        %v342 = vld [vmem:[#allocation2 + $0x28] sm:$0xff]
        %v343 = vld [vmem:[#allocation2 + $0x30] sm:$0xff]
        %v344 = vld [vmem:[#allocation2 + $0x38] sm:$0xff]
        %v345 = vld [vmem:[#allocation2 + $0x40] sm:$0xff]
        %v346 = vld [vmem:[#allocation2 + $0x48] sm:$0xff]
        %v347 = vld [vmem:[#allocation2 + $0x50] sm:$0xff]
        %v348 = vld [vmem:[#allocation2 + $0x58] sm:$0xff]
        %v349 = vld [vmem:[#allocation2 + $0x60] sm:$0xff]
        %v350 = vld [vmem:[#allocation2 + $0x68] sm:$0xff]
        %v351 = vld [vmem:[#allocation2 + $0x70] sm:$0xff]
        %v352 = vld [vmem:[#allocation2 + $0x78] sm:$0xff]
        %v353 = vld [vmem:[#allocation2 + $0x80] sm:$0xff]
        %v354 = vld [vmem:[#allocation2 + $0x88] sm:$0xff]
        %v355 = vld [vmem:[#allocation2 + $0x90] sm:$0xff]
        %v356 = vld [vmem:[#allocation2 + $0x98] sm:$0xff]
        %v357 = vld [vmem:[#allocation2 + $0xa0] sm:$0xff]
        %v358 = vld [vmem:[#allocation2 + $0xa8] sm:$0xff]
        %v359 = vld [vmem:[#allocation2 + $0xb0] sm:$0xff]
        %v360 = vld [vmem:[#allocation2 + $0xb8] sm:$0xff]
        %v361 = vld [vmem:[#allocation2 + $0xc0] sm:$0xff]
        %v362 = vld [vmem:[#allocation2 + $0xc8] sm:$0xff]
        %v363 = vld [vmem:[#allocation2 + $0xd0] sm:$0xff]
        %v364 = vld [vmem:[#allocation2 + $0xd8] sm:$0xff]
        %v365 = vld [vmem:[#allocation2 + $0xe0] sm:$0xff]
        %v366 = vld [vmem:[#allocation2 + $0xe8] sm:$0xff]
        %v367 = vld [vmem:[#allocation2 + $0xf0] sm:$0xff]
        %v368 = vld [vmem:[#allocation2 + $0xf8] sm:$0xff]
        %v369 = vld [vmem:[%s281] sm:$0xff]
        %v370 = vld [vmem:[%s281 + $0x8] sm:$0xf]
        %v371 = vld [vmem:[%s281 + $0xc] sm:$0xff]
        %v372 = vld [vmem:[%s281 + $0x14] sm:$0xf]
        %v373 = vld [vmem:[%s281 + $0x18] sm:$0xff]
        %v374 = vld [vmem:[%s281 + $0x20] sm:$0xf]
        %v375 = vld [vmem:[%s281 + $0x24] sm:$0xff]
        %v376 = vld [vmem:[%s281 + $0x2c] sm:$0xf]
        %v377 = vld [vmem:[%s281 + $0x30] sm:$0xff]
        %v378 = vld [vmem:[%s281 + $0x38] sm:$0xf]
        %v379 = vld [vmem:[%s281 + $0x3c] sm:$0xff]
        %v380 = vld [vmem:[%s281 + $0x44] sm:$0xf]
        %v381 = vld [vmem:[%s281 + $0x48] sm:$0xff]
        %v382 = vld [vmem:[%s281 + $0x50] sm:$0xf]
        %v383 = vld [vmem:[%s281 + $0x54] sm:$0xff]
        %v384 = vld [vmem:[%s281 + $0x5c] sm:$0xf]
        %v385 = vld [vmem:[%s281 + $0x60] sm:$0xff]
        %v386 = vld [vmem:[%s281 + $0x68] sm:$0xf]
        %v387 = vld [vmem:[%s281 + $0x6c] sm:$0xff]
        %v388 = vld [vmem:[%s281 + $0x74] sm:$0xf]
        %v389 = vld [vmem:[%s281 + $0x78] sm:$0xff]
        %v390 = vld [vmem:[%s281 + $0x80] sm:$0xf]
        %v391 = vld [vmem:[%s281 + $0x84] sm:$0xff]
        %v392 = vld [vmem:[%s281 + $0x8c] sm:$0xf]
        %v393 = vld [vmem:[%s281 + $0x90] sm:$0xff]
        %v394 = vld [vmem:[%s281 + $0x98] sm:$0xf]
        %v395 = vld [vmem:[%s281 + $0x9c] sm:$0xff]
        %v396 = vld [vmem:[%s281 + $0xa4] sm:$0xf]
        %v397 = vld [vmem:[%s281 + $0xa8] sm:$0xff]
        %v398 = vld [vmem:[%s281 + $0xb0] sm:$0xf]
        %v399 = vld [vmem:[%s281 + $0xb4] sm:$0xff]
        %v400 = vld [vmem:[%s281 + $0xbc] sm:$0xf]
        %v401 = vld [vmem:[%s281 + $0xc0] sm:$0xff]
        %v402 = vld [vmem:[%s281 + $0xc8] sm:$0xf]
        %v403 = vld [vmem:[%s281 + $0xcc] sm:$0xff]
        %v404 = vld [vmem:[%s281 + $0xd4] sm:$0xf]
        %v405 = vld [vmem:[%s281 + $0xd8] sm:$0xff]
        %v406 = vld [vmem:[%s281 + $0xe0] sm:$0xf]
        %v407 = vld [vmem:[%s281 + $0xe4] sm:$0xff]
        %v408 = vld [vmem:[%s281 + $0xec] sm:$0xf]
        %v409 = vld [vmem:[%s281 + $0xf0] sm:$0xff]
        %v410 = vld [vmem:[%s281 + $0xf8] sm:$0xf]
        %v411 = vld [vmem:[%s281 + $0xfc] sm:$0xff]
        %v412 = vld [vmem:[%s281 + $0x104] sm:$0xf]
        %v413 = vld [vmem:[%s281 + $0x108] sm:$0xff]
        %v414 = vld [vmem:[%s281 + $0x110] sm:$0xf]
        %v415 = vld [vmem:[%s281 + $0x114] sm:$0xff]
        %v416 = vld [vmem:[%s281 + $0x11c] sm:$0xf]
        %v417 = vld [vmem:[%s281 + $0x120] sm:$0xff]
        %v418 = vld [vmem:[%s281 + $0x128] sm:$0xf]
        %v419 = vld [vmem:[%s281 + $0x12c] sm:$0xff]
        %v420 = vld [vmem:[%s281 + $0x134] sm:$0xf]
        %v421 = vld [vmem:[%s281 + $0x138] sm:$0xff]
        %v422 = vld [vmem:[%s281 + $0x140] sm:$0xf]
        %v423 = vld [vmem:[%s281 + $0x144] sm:$0xff]
        %v424 = vld [vmem:[%s281 + $0x14c] sm:$0xf]
        %v425 = vld [vmem:[%s281 + $0x150] sm:$0xff]
        %v426 = vld [vmem:[%s281 + $0x158] sm:$0xf]
        %v427 = vld [vmem:[%s281 + $0x15c] sm:$0xff]
        %v428 = vld [vmem:[%s281 + $0x164] sm:$0xf]
        %v429 = vld [vmem:[%s281 + $0x168] sm:$0xff]
        %v430 = vld [vmem:[%s281 + $0x170] sm:$0xf]
        %v431 = vld [vmem:[%s281 + $0x174] sm:$0xff]
        %v432 = vld [vmem:[%s281 + $0x17c] sm:$0xf]
        %v433 = vld [vmem:[%s291] sm:$0xf]
        %v434 = vld [vmem:[%s291 + $0x4] sm:$0xf]
        %v435 = vld [vmem:[%s291 + $0x8] sm:$0xf]
        %v436 = vld [vmem:[%s291 + $0xc] sm:$0xf]
        %v437 = vld [vmem:[%s291 + $0x10] sm:$0xf]
        %v438 = vld [vmem:[%s291 + $0x14] sm:$0xf]
        %v439 = vld [vmem:[%s291 + $0x18] sm:$0xf]
        %v440 = vld [vmem:[%s291 + $0x1c] sm:$0xf]
        %v441 = vld [vmem:[%s291 + $0x20] sm:$0xf]
        %v442 = vld [vmem:[%s291 + $0x24] sm:$0xf]
        %v443 = vld [vmem:[%s291 + $0x28] sm:$0xf]
        %v444 = vld [vmem:[%s291 + $0x2c] sm:$0xf]
        %v445 = vld [vmem:[%s291 + $0x30] sm:$0xf]
        %v446 = vld [vmem:[%s291 + $0x34] sm:$0xf]
        %v447 = vld [vmem:[%s291 + $0x38] sm:$0xf]
        %v448 = vld [vmem:[%s291 + $0x3c] sm:$0xf]
        %v449 = vld [vmem:[%s291 + $0x40] sm:$0xf]
        %v450 = vld [vmem:[%s291 + $0x44] sm:$0xf]
        %v451 = vld [vmem:[%s291 + $0x48] sm:$0xf]
        %v452 = vld [vmem:[%s291 + $0x4c] sm:$0xf]
        %v453 = vld [vmem:[%s291 + $0x50] sm:$0xf]
        %v454 = vld [vmem:[%s291 + $0x54] sm:$0xf]
        %v455 = vld [vmem:[%s291 + $0x58] sm:$0xf]
        %v456 = vld [vmem:[%s291 + $0x5c] sm:$0xf]
        %v457 = vld [vmem:[%s291 + $0x60] sm:$0xf]
        %v458 = vld [vmem:[%s291 + $0x64] sm:$0xf]
        %v459 = vld [vmem:[%s291 + $0x68] sm:$0xf]
        %v460 = vld [vmem:[%s291 + $0x6c] sm:$0xf]
        %v461 = vld [vmem:[%s291 + $0x70] sm:$0xf]
        %v462 = vld [vmem:[%s291 + $0x74] sm:$0xf]
        %v463 = vld [vmem:[%s291 + $0x78] sm:$0xf]
        %v464 = vld [vmem:[%s291 + $0x7c] sm:$0xf]
        %v465 = vld [vmem:[%s291 + $0x80] sm:$0xf]
        %v466 = vld [vmem:[%s291 + $0x84] sm:$0xf]
        %v467 = vld [vmem:[%s291 + $0x88] sm:$0xf]
        %v468 = vld [vmem:[%s291 + $0x8c] sm:$0xf]
        %v469 = vld [vmem:[%s291 + $0x90] sm:$0xf]
        %v470 = vld [vmem:[%s291 + $0x94] sm:$0xf]
        %v471 = vld [vmem:[%s291 + $0x98] sm:$0xf]
        %v472 = vld [vmem:[%s291 + $0x9c] sm:$0xf]
        %v473 = vld [vmem:[%s291 + $0xa0] sm:$0x3]
        %v538 = vunpack.c.l.b16 %v369
        %v539 = vunpack.c.h.b16 %v369
        %v540 = vunpack.c.l.b16 %v370
        %v541 = vunpack.c.l.b16 %v371
        %v542 = vunpack.c.h.b16 %v371
        %v543 = vunpack.c.l.b16 %v372
        %v544 = vunpack.c.l.b16 %v373
        %v545 = vunpack.c.h.b16 %v373
        %v546 = vunpack.c.l.b16 %v374
        %v547 = vunpack.c.l.b16 %v375
        %v548 = vunpack.c.h.b16 %v375
        %v549 = vunpack.c.l.b16 %v376
        %v550 = vunpack.c.l.b16 %v377
        %v551 = vunpack.c.h.b16 %v377
        %v552 = vunpack.c.l.b16 %v378
        %v553 = vunpack.c.l.b16 %v379
        %v554 = vunpack.c.h.b16 %v379
        %v555 = vunpack.c.l.b16 %v380
        %v556 = vunpack.c.l.b16 %v381
        %v557 = vunpack.c.h.b16 %v381
        %v558 = vunpack.c.l.b16 %v382
        %v559 = vunpack.c.l.b16 %v383
        %v560 = vunpack.c.h.b16 %v383
        %v561 = vunpack.c.l.b16 %v384
        %v562 = vunpack.c.l.b16 %v385
        %v563 = vunpack.c.h.b16 %v385
        %v564 = vunpack.c.l.b16 %v386
        %v565 = vunpack.c.l.b16 %v387
        %v566 = vunpack.c.h.b16 %v387
        %v567 = vunpack.c.l.b16 %v388
        %v568 = vunpack.c.l.b16 %v389
        %v569 = vunpack.c.h.b16 %v389
        %v570 = vunpack.c.l.b16 %v390
        %v571 = vunpack.c.l.b16 %v391
        %v572 = vunpack.c.h.b16 %v391
        %v573 = vunpack.c.l.b16 %v392
        %v574 = vunpack.c.l.b16 %v393
        %v575 = vunpack.c.h.b16 %v393
        %v576 = vunpack.c.l.b16 %v394
        %v577 = vunpack.c.l.b16 %v395
        %v578 = vunpack.c.h.b16 %v395
        %v579 = vunpack.c.l.b16 %v396
        %v580 = vunpack.c.l.b16 %v397
        %v581 = vunpack.c.h.b16 %v397
        %v582 = vunpack.c.l.b16 %v398
        %v583 = vunpack.c.l.b16 %v399
        %v584 = vunpack.c.h.b16 %v399
        %v585 = vunpack.c.l.b16 %v400
        %v586 = vunpack.c.l.b16 %v401
        %v587 = vunpack.c.h.b16 %v401
        %v588 = vunpack.c.l.b16 %v402
        %v589 = vunpack.c.l.b16 %v403
        %v590 = vunpack.c.h.b16 %v403
        %v591 = vunpack.c.l.b16 %v404
        %v592 = vunpack.c.l.b16 %v405
        %v593 = vunpack.c.h.b16 %v405
        %v594 = vunpack.c.l.b16 %v406
        %v595 = vunpack.c.l.b16 %v407
        %v596 = vunpack.c.h.b16 %v407
        %v597 = vunpack.c.l.b16 %v408
        %v598 = vunpack.c.l.b16 %v409
        %v599 = vunpack.c.h.b16 %v409
        %v600 = vunpack.c.l.b16 %v410
        %v601 = vunpack.c.l.b16 %v411
        %v602 = vunpack.c.h.b16 %v411
        %v603 = vunpack.c.l.b16 %v412
        %v604 = vunpack.c.l.b16 %v413
        %v605 = vunpack.c.h.b16 %v413
        %v606 = vunpack.c.l.b16 %v414
        %v607 = vunpack.c.l.b16 %v415
        %v608 = vunpack.c.h.b16 %v415
        %v609 = vunpack.c.l.b16 %v416
        %v610 = vunpack.c.l.b16 %v417
        %v611 = vunpack.c.h.b16 %v417
        %v612 = vunpack.c.l.b16 %v418
        %v613 = vunpack.c.l.b16 %v419
        %v614 = vunpack.c.h.b16 %v419
        %v615 = vunpack.c.l.b16 %v420
        %v616 = vunpack.c.l.b16 %v421
        %v617 = vunpack.c.h.b16 %v421
        %v618 = vunpack.c.l.b16 %v422
        %v619 = vunpack.c.l.b16 %v423
        %v620 = vunpack.c.h.b16 %v423
        %v621 = vunpack.c.l.b16 %v424
        %v622 = vunpack.c.l.b16 %v425
        %v623 = vunpack.c.h.b16 %v425
        %v624 = vunpack.c.l.b16 %v426
        %v625 = vunpack.c.l.b16 %v427
        %v626 = vunpack.c.h.b16 %v427
        %v627 = vunpack.c.l.b16 %v428
        %v628 = vunpack.c.l.b16 %v429
        %v629 = vunpack.c.h.b16 %v429
        %v630 = vunpack.c.l.b16 %v430
        %v631 = vunpack.c.l.b16 %v431
        %v632 = vunpack.c.h.b16 %v431
        %v633 = vunpack.c.l.b16 %v432
        %v634 = vpack.c.b16 %v541, %v538
        %v635 = vpack.c.b16 %v542, %v539
        %v636 = vpack.c.b16 %v543, %v540
        %v637 = vpack.c.b16 %v547, %v544
        %v638 = vpack.c.b16 %v548, %v545
        %v639 = vpack.c.b16 %v549, %v546
        %v640 = vpack.c.b16 %v553, %v550
        %v641 = vpack.c.b16 %v554, %v551
        %v642 = vpack.c.b16 %v555, %v552
        %v643 = vpack.c.b16 %v559, %v556
        %v644 = vpack.c.b16 %v560, %v557
        %v645 = vpack.c.b16 %v561, %v558
        %v646 = vpack.c.b16 %v565, %v562
        %v647 = vpack.c.b16 %v566, %v563
        %v648 = vpack.c.b16 %v567, %v564
        %v649 = vpack.c.b16 %v571, %v568
        %v650 = vpack.c.b16 %v572, %v569
        %v651 = vpack.c.b16 %v573, %v570
        %v652 = vpack.c.b16 %v577, %v574
        %v653 = vpack.c.b16 %v578, %v575
        %v654 = vpack.c.b16 %v579, %v576
        %v655 = vpack.c.b16 %v583, %v580
        %v656 = vpack.c.b16 %v584, %v581
        %v657 = vpack.c.b16 %v585, %v582
        %v658 = vpack.c.b16 %v589, %v586
        %v659 = vpack.c.b16 %v590, %v587
        %v660 = vpack.c.b16 %v591, %v588
        %v661 = vpack.c.b16 %v595, %v592
        %v662 = vpack.c.b16 %v596, %v593
        %v663 = vpack.c.b16 %v597, %v594
        %v664 = vpack.c.b16 %v601, %v598
        %v665 = vpack.c.b16 %v602, %v599
        %v666 = vpack.c.b16 %v603, %v600
        %v667 = vpack.c.b16 %v607, %v604
        %v668 = vpack.c.b16 %v608, %v605
        %v669 = vpack.c.b16 %v609, %v606
        %v670 = vpack.c.b16 %v613, %v610
        %v671 = vpack.c.b16 %v614, %v611
        %v672 = vpack.c.b16 %v615, %v612
        %v673 = vpack.c.b16 %v619, %v616
        %v674 = vpack.c.b16 %v620, %v617
        %v675 = vpack.c.b16 %v621, %v618
        %v676 = vpack.c.b16 %v625, %v622
        %v677 = vpack.c.b16 %v626, %v623
        %v678 = vpack.c.b16 %v627, %v624
        %v679 = vpack.c.b16 %v631, %v628
        %v680 = vpack.c.b16 %v632, %v629
        %v681 = vpack.c.b16 %v633, %v630
        %v755 = vunpack.c.l.b16 %v433
        %v756 = vunpack.c.l.b16 %v434
        %v757 = vunpack.c.l.b16 %v435
        %v758 = vunpack.c.l.b16 %v436
        %v759 = vunpack.c.l.b16 %v437
        %v760 = vunpack.c.l.b16 %v438
        %v761 = vunpack.c.l.b16 %v439
        %v762 = vunpack.c.l.b16 %v440
        %v763 = vunpack.c.l.b16 %v441
        %v764 = vunpack.c.l.b16 %v442
        %v765 = vunpack.c.l.b16 %v443
        %v766 = vunpack.c.l.b16 %v444
        %v767 = vunpack.c.l.b16 %v445
        %v768 = vunpack.c.l.b16 %v446
        %v769 = vunpack.c.l.b16 %v447
        %v770 = vunpack.c.l.b16 %v448
        %v771 = vunpack.c.l.b16 %v449
        %v772 = vunpack.c.l.b16 %v450
        %v773 = vunpack.c.l.b16 %v451
        %v774 = vunpack.c.l.b16 %v452
        %v775 = vunpack.c.l.b16 %v453
        %v776 = vunpack.c.l.b16 %v454
        %v777 = vunpack.c.l.b16 %v455
        %v778 = vunpack.c.l.b16 %v456
        %v779 = vunpack.c.l.b16 %v457
        %v780 = vunpack.c.l.b16 %v458
        %v781 = vunpack.c.l.b16 %v459
        %v782 = vunpack.c.l.b16 %v460
        %v783 = vunpack.c.l.b16 %v461
        %v784 = vunpack.c.l.b16 %v462
        %v785 = vunpack.c.l.b16 %v463
        %v786 = vunpack.c.l.b16 %v464
        %v787 = vunpack.c.l.b16 %v465
        %v788 = vunpack.c.l.b16 %v466
        %v789 = vunpack.c.l.b16 %v467
        %v790 = vunpack.c.l.b16 %v468
        %v791 = vunpack.c.l.b16 %v469
        %v792 = vunpack.c.l.b16 %v470
        %v793 = vunpack.c.l.b16 %v471
        %v794 = vunpack.c.l.b16 %v472
        %v795 = vunpack.c.l.b16 %v473
        %v796 = vpack.c.b16 %v756, %v755
        %v797 = vpack.c.b16 %v758, %v757
        %v798 = vpack.c.b16 %v760, %v759
        %v799 = vpack.c.b16 %v762, %v761
        %v800 = vpack.c.b16 %v764, %v763
        %v801 = vpack.c.b16 %v766, %v765
        %v802 = vpack.c.b16 %v768, %v767
        %v803 = vpack.c.b16 %v770, %v769
        %v804 = vpack.c.b16 %v772, %v771
        %v805 = vpack.c.b16 %v774, %v773
        %v806 = vpack.c.b16 %v776, %v775
        %v807 = vpack.c.b16 %v778, %v777
        %v808 = vpack.c.b16 %v780, %v779
        %v809 = vpack.c.b16 %v782, %v781
        %v810 = vpack.c.b16 %v784, %v783
        %v811 = vpack.c.b16 %v786, %v785
        %v812 = vpack.c.b16 %v788, %v787
        %v813 = vpack.c.b16 %v790, %v789
        %v814 = vpack.c.b16 %v792, %v791
        %v815 = vpack.c.b16 %v794, %v793
        %v816 = vpack.c.b16 %v795, %v795
        %vm837 = vcmask 556032
        %v839 = vsel %vm837, %v636, 0
        %v842 = vsel %vm837, %v639, 0
        %v845 = vsel %vm837, %v642, 0
        %v848 = vsel %vm837, %v645, 0
        %v851 = vsel %vm837, %v648, 0
        %v854 = vsel %vm837, %v651, 0
        %v857 = vsel %vm837, %v654, 0
        %v860 = vsel %vm837, %v657, 0
        %v863 = vsel %vm837, %v660, 0
        %v866 = vsel %vm837, %v663, 0
        %v869 = vsel %vm837, %v666, 0
        %v872 = vsel %vm837, %v669, 0
        %v875 = vsel %vm837, %v672, 0
        %v878 = vsel %vm837, %v675, 0
        %v881 = vsel %vm837, %v678, 0
        %v884 = vsel %vm837, %v681, 0
        %vm886 = vcmask 1041408
        %v888 = vsel %vm886, %v816, 0
        %890 = vmatpush.bf16.msra.mxu0 %v803
        %891 = vmatpush.bf16.msra.mxu0 %v802
        %892 = vmatpush.bf16.msra.mxu0 %v801
        %893 = vmatpush.bf16.msra.mxu0 %v800
        %894 = vmatpush.bf16.msra.mxu0 %v799
        %895 = vmatpush.bf16.msra.mxu0 %v798
        %896 = vmatpush.bf16.msra.mxu0 %v797
        %897 = vmatpush.bf16.msra.mxu0 %v796
        %898 = vmatmul.bf16.gmra.mxu0 %v634
        %v899 = vpop.f32.mrf.mxu0
        %v900 = vadd.f32 0.0, %v899
        %v901 = vpop.f32.mrf.mxu0
        %v902 = vadd.f32 0.0, %v901
        %903 = vmatmul.bf16.gmra.mxu0 %v637
        %v904 = vpop.f32.mrf.mxu0
        %v905 = vadd.f32 0.0, %v904
        %v906 = vpop.f32.mrf.mxu0
        %v907 = vadd.f32 0.0, %v906
        %908 = vmatmul.bf16.gmra.mxu0 %v640
        %v909 = vpop.f32.mrf.mxu0
        %v910 = vadd.f32 0.0, %v909
        %v911 = vpop.f32.mrf.mxu0
        %v912 = vadd.f32 0.0, %v911
        %913 = vmatmul.bf16.gmra.mxu0 %v643
        %v914 = vpop.f32.mrf.mxu0
        %v915 = vadd.f32 0.0, %v914
        %v916 = vpop.f32.mrf.mxu0
        %v917 = vadd.f32 0.0, %v916
        %918 = vmatmul.bf16.gmra.mxu0 %v646
        %v919 = vpop.f32.mrf.mxu0
        %v920 = vadd.f32 0.0, %v919
        %v921 = vpop.f32.mrf.mxu0
        %v922 = vadd.f32 0.0, %v921
        %923 = vmatmul.bf16.gmra.mxu0 %v649
        %v924 = vpop.f32.mrf.mxu0
        %v925 = vadd.f32 0.0, %v924
        %v926 = vpop.f32.mrf.mxu0
        %v927 = vadd.f32 0.0, %v926
        %928 = vmatmul.bf16.gmra.mxu0 %v652
        %v929 = vpop.f32.mrf.mxu0
        %v930 = vadd.f32 0.0, %v929
        %v931 = vpop.f32.mrf.mxu0
        %v932 = vadd.f32 0.0, %v931
        %933 = vmatmul.bf16.gmra.mxu0 %v655
        %v934 = vpop.f32.mrf.mxu0
        %v935 = vadd.f32 0.0, %v934
        %v936 = vpop.f32.mrf.mxu0
        %v937 = vadd.f32 0.0, %v936
        %938 = vmatmul.bf16.gmra.mxu0 %v658
        %v939 = vpop.f32.mrf.mxu0
        %v940 = vadd.f32 0.0, %v939
        %v941 = vpop.f32.mrf.mxu0
        %v942 = vadd.f32 0.0, %v941
        %943 = vmatmul.bf16.gmra.mxu0 %v661
        %v944 = vpop.f32.mrf.mxu0
        %v945 = vadd.f32 0.0, %v944
        %v946 = vpop.f32.mrf.mxu0
        %v947 = vadd.f32 0.0, %v946
        %948 = vmatmul.bf16.gmra.mxu0 %v664
        %v949 = vpop.f32.mrf.mxu0
        %v950 = vadd.f32 0.0, %v949
        %v951 = vpop.f32.mrf.mxu0
        %v952 = vadd.f32 0.0, %v951
        %953 = vmatmul.bf16.gmra.mxu0 %v667
        %v954 = vpop.f32.mrf.mxu0
        %v955 = vadd.f32 0.0, %v954
        %v956 = vpop.f32.mrf.mxu0
        %v957 = vadd.f32 0.0, %v956
        %958 = vmatmul.bf16.gmra.mxu0 %v670
        %v959 = vpop.f32.mrf.mxu0
        %v960 = vadd.f32 0.0, %v959
        %v961 = vpop.f32.mrf.mxu0
        %v962 = vadd.f32 0.0, %v961
        %963 = vmatmul.bf16.gmra.mxu0 %v673
        %v964 = vpop.f32.mrf.mxu0
        %v965 = vadd.f32 0.0, %v964
        %v966 = vpop.f32.mrf.mxu0
        %v967 = vadd.f32 0.0, %v966
        %968 = vmatmul.bf16.gmra.mxu0 %v676
        %v969 = vpop.f32.mrf.mxu0
        %v970 = vadd.f32 0.0, %v969
        %v971 = vpop.f32.mrf.mxu0
        %v972 = vadd.f32 0.0, %v971
        %973 = vmatmul.bf16.gmra.mxu0 %v679
        %v974 = vpop.f32.mrf.mxu0
        %v975 = vadd.f32 0.0, %v974
        %v976 = vpop.f32.mrf.mxu0
        %v977 = vadd.f32 0.0, %v976
        %978 = vdwg.mxu0
        %979 = vmatpush.bf16.msra.mxu0 %v811
        %980 = vmatpush.bf16.msra.mxu0 %v810
        %981 = vmatpush.bf16.msra.mxu0 %v809
        %982 = vmatpush.bf16.msra.mxu0 %v808
        %983 = vmatpush.bf16.msra.mxu0 %v807
        %984 = vmatpush.bf16.msra.mxu0 %v806
        %985 = vmatpush.bf16.msra.mxu0 %v805
        %986 = vmatpush.bf16.msra.mxu0 %v804
        %987 = vmatmul.bf16.gmra.mxu0 %v635
        %v988 = vpop.f32.mrf.mxu0
        %v989 = vadd.f32 %v900, %v988
        %v990 = vpop.f32.mrf.mxu0
        %v991 = vadd.f32 %v902, %v990
        %992 = vmatmul.bf16.gmra.mxu0 %v638
        %v993 = vpop.f32.mrf.mxu0
        %v994 = vadd.f32 %v905, %v993
        %v995 = vpop.f32.mrf.mxu0
        %v996 = vadd.f32 %v907, %v995
        %997 = vmatmul.bf16.gmra.mxu0 %v641
        %v998 = vpop.f32.mrf.mxu0
        %v999 = vadd.f32 %v910, %v998
        %v1000 = vpop.f32.mrf.mxu0
        %v1001 = vadd.f32 %v912, %v1000
        %1002 = vmatmul.bf16.gmra.mxu0 %v644
        %v1003 = vpop.f32.mrf.mxu0
        %v1004 = vadd.f32 %v915, %v1003
        %v1005 = vpop.f32.mrf.mxu0
        %v1006 = vadd.f32 %v917, %v1005
        %1007 = vmatmul.bf16.gmra.mxu0 %v647
        %v1008 = vpop.f32.mrf.mxu0
        %v1009 = vadd.f32 %v920, %v1008
        %v1010 = vpop.f32.mrf.mxu0
        %v1011 = vadd.f32 %v922, %v1010
        %1012 = vmatmul.bf16.gmra.mxu0 %v650
        %v1013 = vpop.f32.mrf.mxu0
        %v1014 = vadd.f32 %v925, %v1013
        %v1015 = vpop.f32.mrf.mxu0
        %v1016 = vadd.f32 %v927, %v1015
        %1017 = vmatmul.bf16.gmra.mxu0 %v653
        %v1018 = vpop.f32.mrf.mxu0
        %v1019 = vadd.f32 %v930, %v1018
        %v1020 = vpop.f32.mrf.mxu0
        %v1021 = vadd.f32 %v932, %v1020
        %1022 = vmatmul.bf16.gmra.mxu0 %v656
        %v1023 = vpop.f32.mrf.mxu0
        %v1024 = vadd.f32 %v935, %v1023
        %v1025 = vpop.f32.mrf.mxu0
        %v1026 = vadd.f32 %v937, %v1025
        %1027 = vmatmul.bf16.gmra.mxu0 %v659
        %v1028 = vpop.f32.mrf.mxu0
        %v1029 = vadd.f32 %v940, %v1028
        %v1030 = vpop.f32.mrf.mxu0
        %v1031 = vadd.f32 %v942, %v1030
        %1032 = vmatmul.bf16.gmra.mxu0 %v662
        %v1033 = vpop.f32.mrf.mxu0
        %v1034 = vadd.f32 %v945, %v1033
        %v1035 = vpop.f32.mrf.mxu0
        %v1036 = vadd.f32 %v947, %v1035
        %1037 = vmatmul.bf16.gmra.mxu0 %v665
        %v1038 = vpop.f32.mrf.mxu0
        %v1039 = vadd.f32 %v950, %v1038
        %v1040 = vpop.f32.mrf.mxu0
        %v1041 = vadd.f32 %v952, %v1040
        %1042 = vmatmul.bf16.gmra.mxu0 %v668
        %v1043 = vpop.f32.mrf.mxu0
        %v1044 = vadd.f32 %v955, %v1043
        %v1045 = vpop.f32.mrf.mxu0
        %v1046 = vadd.f32 %v957, %v1045
        %1047 = vmatmul.bf16.gmra.mxu0 %v671
        %v1048 = vpop.f32.mrf.mxu0
        %v1049 = vadd.f32 %v960, %v1048
        %v1050 = vpop.f32.mrf.mxu0
        %v1051 = vadd.f32 %v962, %v1050
        %1052 = vmatmul.bf16.gmra.mxu0 %v674
        %v1053 = vpop.f32.mrf.mxu0
        %v1054 = vadd.f32 %v965, %v1053
        %v1055 = vpop.f32.mrf.mxu0
        %v1056 = vadd.f32 %v967, %v1055
        %1057 = vmatmul.bf16.gmra.mxu0 %v677
        %v1058 = vpop.f32.mrf.mxu0
        %v1059 = vadd.f32 %v970, %v1058
        %v1060 = vpop.f32.mrf.mxu0
        %v1061 = vadd.f32 %v972, %v1060
        %1062 = vmatmul.bf16.gmra.mxu0 %v680
        %v1063 = vpop.f32.mrf.mxu0
        %v1064 = vadd.f32 %v975, %v1063
        %v1065 = vpop.f32.mrf.mxu0
        %v1066 = vadd.f32 %v977, %v1065
        %1067 = vdwg.mxu0
        %1068 = vmatpush.bf16.msra.mxu0 0
        %1069 = vmatpush.bf16.msra.mxu0 0
        %1070 = vmatpush.bf16.msra.mxu0 0
        %1071 = vmatpush.bf16.msra.mxu0 %v888
        %1072 = vmatpush.bf16.msra.mxu0 %v815
        %1073 = vmatpush.bf16.msra.mxu0 %v814
        %1074 = vmatpush.bf16.msra.mxu0 %v813
        %1075 = vmatpush.bf16.msra.mxu0 %v812
        %1076 = vmatmul.bf16.gmra.mxu0 %v839
        %v1077 = vpop.f32.mrf.mxu0
        %v1078 = vadd.f32 %v989, %v1077
        %v1079 = vpop.f32.mrf.mxu0
        %v1080 = vadd.f32 %v991, %v1079
        %1081 = vmatmul.bf16.gmra.mxu0 %v842
        %v1082 = vpop.f32.mrf.mxu0
        %v1083 = vadd.f32 %v994, %v1082
        %v1084 = vpop.f32.mrf.mxu0
        %v1085 = vadd.f32 %v996, %v1084
        %1086 = vmatmul.bf16.gmra.mxu0 %v845
        %v1087 = vpop.f32.mrf.mxu0
        %v1088 = vadd.f32 %v999, %v1087
        %v1089 = vpop.f32.mrf.mxu0
        %v1090 = vadd.f32 %v1001, %v1089
        %1091 = vmatmul.bf16.gmra.mxu0 %v848
        %v1092 = vpop.f32.mrf.mxu0
        %v1093 = vadd.f32 %v1004, %v1092
        %v1094 = vpop.f32.mrf.mxu0
        %v1095 = vadd.f32 %v1006, %v1094
        %1096 = vmatmul.bf16.gmra.mxu0 %v851
        %v1097 = vpop.f32.mrf.mxu0
        %v1098 = vadd.f32 %v1009, %v1097
        %v1099 = vpop.f32.mrf.mxu0
        %v1100 = vadd.f32 %v1011, %v1099
        %1101 = vmatmul.bf16.gmra.mxu0 %v854
        %v1102 = vpop.f32.mrf.mxu0
        %v1103 = vadd.f32 %v1014, %v1102
        %v1104 = vpop.f32.mrf.mxu0
        %v1105 = vadd.f32 %v1016, %v1104
        %1106 = vmatmul.bf16.gmra.mxu0 %v857
        %v1107 = vpop.f32.mrf.mxu0
        %v1108 = vadd.f32 %v1019, %v1107
        %v1109 = vpop.f32.mrf.mxu0
        %v1110 = vadd.f32 %v1021, %v1109
        %1111 = vmatmul.bf16.gmra.mxu0 %v860
        %v1112 = vpop.f32.mrf.mxu0
        %v1113 = vadd.f32 %v1024, %v1112
        %v1114 = vpop.f32.mrf.mxu0
        %v1115 = vadd.f32 %v1026, %v1114
        %1116 = vmatmul.bf16.gmra.mxu0 %v863
        %v1117 = vpop.f32.mrf.mxu0
        %v1118 = vadd.f32 %v1029, %v1117
        %v1119 = vpop.f32.mrf.mxu0
        %v1120 = vadd.f32 %v1031, %v1119
        %1121 = vmatmul.bf16.gmra.mxu0 %v866
        %v1122 = vpop.f32.mrf.mxu0
        %v1123 = vadd.f32 %v1034, %v1122
        %v1124 = vpop.f32.mrf.mxu0
        %v1125 = vadd.f32 %v1036, %v1124
        %1126 = vmatmul.bf16.gmra.mxu0 %v869
        %v1127 = vpop.f32.mrf.mxu0
        %v1128 = vadd.f32 %v1039, %v1127
        %v1129 = vpop.f32.mrf.mxu0
        %v1130 = vadd.f32 %v1041, %v1129
        %1131 = vmatmul.bf16.gmra.mxu0 %v872
        %v1132 = vpop.f32.mrf.mxu0
        %v1133 = vadd.f32 %v1044, %v1132
        %v1134 = vpop.f32.mrf.mxu0
        %v1135 = vadd.f32 %v1046, %v1134
        %1136 = vmatmul.bf16.gmra.mxu0 %v875
        %v1137 = vpop.f32.mrf.mxu0
        %v1138 = vadd.f32 %v1049, %v1137
        %v1139 = vpop.f32.mrf.mxu0
        %v1140 = vadd.f32 %v1051, %v1139
        %1141 = vmatmul.bf16.gmra.mxu0 %v878
        %v1142 = vpop.f32.mrf.mxu0
        %v1143 = vadd.f32 %v1054, %v1142
        %v1144 = vpop.f32.mrf.mxu0
        %v1145 = vadd.f32 %v1056, %v1144
        %1146 = vmatmul.bf16.gmra.mxu0 %v881
        %v1147 = vpop.f32.mrf.mxu0
        %v1148 = vadd.f32 %v1059, %v1147
        %v1149 = vpop.f32.mrf.mxu0
        %v1150 = vadd.f32 %v1061, %v1149
        %1151 = vmatmul.bf16.gmra.mxu0 %v884
        %v1152 = vpop.f32.mrf.mxu0
        %v1153 = vadd.f32 %v1064, %v1152
        %v1154 = vpop.f32.mrf.mxu0
        %v1155 = vadd.f32 %v1066, %v1154
        %1156 = vdwg.mxu0
        %v1157 = vadd.f32 %v337, %v1078
        %v1158 = vadd.f32 %v338, %v1080
        %v1159 = vadd.f32 %v339, %v1083
        %v1160 = vadd.f32 %v340, %v1085
        %v1161 = vadd.f32 %v341, %v1088
        %v1162 = vadd.f32 %v342, %v1090
        %v1163 = vadd.f32 %v343, %v1093
        %v1164 = vadd.f32 %v344, %v1095
        %v1165 = vadd.f32 %v345, %v1098
        %v1166 = vadd.f32 %v346, %v1100
        %v1167 = vadd.f32 %v347, %v1103
        %v1168 = vadd.f32 %v348, %v1105
        %v1169 = vadd.f32 %v349, %v1108
        %v1170 = vadd.f32 %v350, %v1110
        %v1171 = vadd.f32 %v351, %v1113
        %v1172 = vadd.f32 %v352, %v1115
        %v1173 = vadd.f32 %v353, %v1118
        %v1174 = vadd.f32 %v354, %v1120
        %v1175 = vadd.f32 %v355, %v1123
        %v1176 = vadd.f32 %v356, %v1125
        %v1177 = vadd.f32 %v357, %v1128
        %v1178 = vadd.f32 %v358, %v1130
        %v1179 = vadd.f32 %v359, %v1133
        %v1180 = vadd.f32 %v360, %v1135
        %v1181 = vadd.f32 %v361, %v1138
        %v1182 = vadd.f32 %v362, %v1140
        %v1183 = vadd.f32 %v363, %v1143
        %v1184 = vadd.f32 %v364, %v1145
        %v1185 = vadd.f32 %v365, %v1148
        %v1186 = vadd.f32 %v366, %v1150
        %v1187 = vadd.f32 %v367, %v1153
        %v1188 = vadd.f32 %v368, %v1155
        %1189 = vst [vmem:[#allocation2] sm:$0xff] %v1157
        %1190 = vst [vmem:[#allocation2 + $0x8] sm:$0xff] %v1158
        %1191 = vst [vmem:[#allocation2 + $0x10] sm:$0xff] %v1159
        %1192 = vst [vmem:[#allocation2 + $0x18] sm:$0xff] %v1160
        %1193 = vst [vmem:[#allocation2 + $0x20] sm:$0xff] %v1161
        %1194 = vst [vmem:[#allocation2 + $0x28] sm:$0xff] %v1162
        %1195 = vst [vmem:[#allocation2 + $0x30] sm:$0xff] %v1163
        %1196 = vst [vmem:[#allocation2 + $0x38] sm:$0xff] %v1164
        %1197 = vst [vmem:[#allocation2 + $0x40] sm:$0xff] %v1165
        %1198 = vst [vmem:[#allocation2 + $0x48] sm:$0xff] %v1166
        %1199 = vst [vmem:[#allocation2 + $0x50] sm:$0xff] %v1167
        %1200 = vst [vmem:[#allocation2 + $0x58] sm:$0xff] %v1168
        %1201 = vst [vmem:[#allocation2 + $0x60] sm:$0xff] %v1169
        %1202 = vst [vmem:[#allocation2 + $0x68] sm:$0xff] %v1170
        %1203 = vst [vmem:[#allocation2 + $0x70] sm:$0xff] %v1171
        %1204 = vst [vmem:[#allocation2 + $0x78] sm:$0xff] %v1172
        %1205 = vst [vmem:[#allocation2 + $0x80] sm:$0xff] %v1173
        %1206 = vst [vmem:[#allocation2 + $0x88] sm:$0xff] %v1174
        %1207 = vst [vmem:[#allocation2 + $0x90] sm:$0xff] %v1175
        %1208 = vst [vmem:[#allocation2 + $0x98] sm:$0xff] %v1176
        %1209 = vst [vmem:[#allocation2 + $0xa0] sm:$0xff] %v1177
        %1210 = vst [vmem:[#allocation2 + $0xa8] sm:$0xff] %v1178
        %1211 = vst [vmem:[#allocation2 + $0xb0] sm:$0xff] %v1179
        %1212 = vst [vmem:[#allocation2 + $0xb8] sm:$0xff] %v1180
        %1213 = vst [vmem:[#allocation2 + $0xc0] sm:$0xff] %v1181
        %1214 = vst [vmem:[#allocation2 + $0xc8] sm:$0xff] %v1182
        %1215 = vst [vmem:[#allocation2 + $0xd0] sm:$0xff] %v1183
        %1216 = vst [vmem:[#allocation2 + $0xd8] sm:$0xff] %v1184
        %1217 = vst [vmem:[#allocation2 + $0xe0] sm:$0xff] %v1185
        %1218 = vst [vmem:[#allocation2 + $0xe8] sm:$0xff] %v1186
        %1219 = vst [vmem:[#allocation2 + $0xf0] sm:$0xff] %v1187
        %1220 = vst [vmem:[#allocation2 + $0xf8] sm:$0xff] %v1188
        // Predicated region
        $region41: #{tpu_custom_call.1} parent=35 // pred_check
          %p1221 = pneg %p301
        $region42: #{tpu_custom_call.1} parent=35 // pred_check_branch
          %1223 = sbr.rel (%p1221) target = $region44
        $region43: #{tpu_custom_call.1} parent=35 // pred_region
          %v1224 = vld [vmem:[#allocation2] sm:$0xff]
          %v1225 = vld [vmem:[#allocation2 + $0x8] sm:$0xff]
          %v1226 = vld [vmem:[#allocation2 + $0x10] sm:$0xff]
          %v1227 = vld [vmem:[#allocation2 + $0x18] sm:$0xff]
          %v1228 = vld [vmem:[#allocation2 + $0x20] sm:$0xff]
          %v1229 = vld [vmem:[#allocation2 + $0x28] sm:$0xff]
          %v1230 = vld [vmem:[#allocation2 + $0x30] sm:$0xff]
          %v1231 = vld [vmem:[#allocation2 + $0x38] sm:$0xff]
          %v1232 = vld [vmem:[#allocation2 + $0x40] sm:$0xff]
          %v1233 = vld [vmem:[#allocation2 + $0x48] sm:$0xff]
          %v1234 = vld [vmem:[#allocation2 + $0x50] sm:$0xff]
          %v1235 = vld [vmem:[#allocation2 + $0x58] sm:$0xff]
          %v1236 = vld [vmem:[#allocation2 + $0x60] sm:$0xff]
          %v1237 = vld [vmem:[#allocation2 + $0x68] sm:$0xff]
          %v1238 = vld [vmem:[#allocation2 + $0x70] sm:$0xff]
          %v1239 = vld [vmem:[#allocation2 + $0x78] sm:$0xff]
          %v1240 = vld [vmem:[#allocation2 + $0x80] sm:$0xff]
          %v1241 = vld [vmem:[#allocation2 + $0x88] sm:$0xff]
          %v1242 = vld [vmem:[#allocation2 + $0x90] sm:$0xff]
          %v1243 = vld [vmem:[#allocation2 + $0x98] sm:$0xff]
          %v1244 = vld [vmem:[#allocation2 + $0xa0] sm:$0xff]
          %v1245 = vld [vmem:[#allocation2 + $0xa8] sm:$0xff]
          %v1246 = vld [vmem:[#allocation2 + $0xb0] sm:$0xff]
          %v1247 = vld [vmem:[#allocation2 + $0xb8] sm:$0xff]
          %v1248 = vld [vmem:[#allocation2 + $0xc0] sm:$0xff]
          %v1249 = vld [vmem:[#allocation2 + $0xc8] sm:$0xff]
          %v1250 = vld [vmem:[#allocation2 + $0xd0] sm:$0xff]
          %v1251 = vld [vmem:[#allocation2 + $0xd8] sm:$0xff]
          %v1252 = vld [vmem:[#allocation2 + $0xe0] sm:$0xff]
          %v1253 = vld [vmem:[#allocation2 + $0xe8] sm:$0xff]
          %v1254 = vld [vmem:[#allocation2 + $0xf0] sm:$0xff]
          %v1255 = vld [vmem:[#allocation2 + $0xf8] sm:$0xff]
          %v1256 = vld [vmem:[%s295] sm:$0x1]
          %v1258 = vperm.slane %v1256, 0
          %v1260 = vmul.f32 %v1224, %v1258
          %v1261 = vmul.f32 %v1225, %v1258
          %v1262 = vmul.f32 %v1226, %v1258
          %v1263 = vmul.f32 %v1227, %v1258
          %v1264 = vmul.f32 %v1228, %v1258
          %v1265 = vmul.f32 %v1229, %v1258
          %v1266 = vmul.f32 %v1230, %v1258
          %v1267 = vmul.f32 %v1231, %v1258
          %v1268 = vmul.f32 %v1232, %v1258
          %v1269 = vmul.f32 %v1233, %v1258
          %v1270 = vmul.f32 %v1234, %v1258
          %v1271 = vmul.f32 %v1235, %v1258
          %v1272 = vmul.f32 %v1236, %v1258
          %v1273 = vmul.f32 %v1237, %v1258
          %v1274 = vmul.f32 %v1238, %v1258
          %v1275 = vmul.f32 %v1239, %v1258
          %v1276 = vmul.f32 %v1240, %v1258
          %v1277 = vmul.f32 %v1241, %v1258
          %v1278 = vmul.f32 %v1242, %v1258
          %v1279 = vmul.f32 %v1243, %v1258
          %v1280 = vmul.f32 %v1244, %v1258
          %v1281 = vmul.f32 %v1245, %v1258
          %v1282 = vmul.f32 %v1246, %v1258
          %v1283 = vmul.f32 %v1247, %v1258
          %v1284 = vmul.f32 %v1248, %v1258
          %v1285 = vmul.f32 %v1249, %v1258
          %v1286 = vmul.f32 %v1250, %v1258
          %v1287 = vmul.f32 %v1251, %v1258
          %v1288 = vmul.f32 %v1252, %v1258
          %v1289 = vmul.f32 %v1253, %v1258
          %v1290 = vmul.f32 %v1254, %v1258
          %v1291 = vmul.f32 %v1255, %v1258
          %v1292 = vld [vmem:[%s298] sm:$0x1]
          %v1294 = vperm.slane %v1292, 0
          %v1296 = vadd.f32 %v1260, %v1294
          %v1297 = vadd.f32 %v1261, %v1294
          %v1298 = vadd.f32 %v1262, %v1294
          %v1299 = vadd.f32 %v1263, %v1294
          %v1300 = vadd.f32 %v1264, %v1294
          %v1301 = vadd.f32 %v1265, %v1294
          %v1302 = vadd.f32 %v1266, %v1294
          %v1303 = vadd.f32 %v1267, %v1294
          %v1304 = vadd.f32 %v1268, %v1294
          %v1305 = vadd.f32 %v1269, %v1294
          %v1306 = vadd.f32 %v1270, %v1294
          %v1307 = vadd.f32 %v1271, %v1294
          %v1308 = vadd.f32 %v1272, %v1294
          %v1309 = vadd.f32 %v1273, %v1294
          %v1310 = vadd.f32 %v1274, %v1294
          %v1311 = vadd.f32 %v1275, %v1294
          %v1312 = vadd.f32 %v1276, %v1294
          %v1313 = vadd.f32 %v1277, %v1294
          %v1314 = vadd.f32 %v1278, %v1294
          %v1315 = vadd.f32 %v1279, %v1294
          %v1316 = vadd.f32 %v1280, %v1294
          %v1317 = vadd.f32 %v1281, %v1294
          %v1318 = vadd.f32 %v1282, %v1294
          %v1319 = vadd.f32 %v1283, %v1294
          %v1320 = vadd.f32 %v1284, %v1294
          %v1321 = vadd.f32 %v1285, %v1294
          %v1322 = vadd.f32 %v1286, %v1294
          %v1323 = vadd.f32 %v1287, %v1294
          %v1324 = vadd.f32 %v1288, %v1294
          %v1325 = vadd.f32 %v1289, %v1294
          %v1326 = vadd.f32 %v1290, %v1294
          %v1327 = vadd.f32 %v1291, %v1294
          %v1328 = vmax.f32 %v1296, 0.0
          %v1329 = vmax.f32 %v1297, 0.0
          %v1330 = vmax.f32 %v1298, 0.0
          %v1331 = vmax.f32 %v1299, 0.0
          %v1332 = vmax.f32 %v1300, 0.0
          %v1333 = vmax.f32 %v1301, 0.0
          %v1334 = vmax.f32 %v1302, 0.0
          %v1335 = vmax.f32 %v1303, 0.0
          %v1336 = vmax.f32 %v1304, 0.0
          %v1337 = vmax.f32 %v1305, 0.0
          %v1338 = vmax.f32 %v1306, 0.0
          %v1339 = vmax.f32 %v1307, 0.0
          %v1340 = vmax.f32 %v1308, 0.0
          %v1341 = vmax.f32 %v1309, 0.0
          %v1342 = vmax.f32 %v1310, 0.0
          %v1343 = vmax.f32 %v1311, 0.0
          %v1344 = vmax.f32 %v1312, 0.0
          %v1345 = vmax.f32 %v1313, 0.0
          %v1346 = vmax.f32 %v1314, 0.0
          %v1347 = vmax.f32 %v1315, 0.0
          %v1348 = vmax.f32 %v1316, 0.0
          %v1349 = vmax.f32 %v1317, 0.0
          %v1350 = vmax.f32 %v1318, 0.0
          %v1351 = vmax.f32 %v1319, 0.0
          %v1352 = vmax.f32 %v1320, 0.0
          %v1353 = vmax.f32 %v1321, 0.0
          %v1354 = vmax.f32 %v1322, 0.0
          %v1355 = vmax.f32 %v1323, 0.0
          %v1356 = vmax.f32 %v1324, 0.0
          %v1357 = vmax.f32 %v1325, 0.0
          %v1358 = vmax.f32 %v1326, 0.0
          %v1359 = vmax.f32 %v1327, 0.0
          %v1360 = vpack.c.bf16 %v1328, %v1328
          %v1361 = vpack.c.bf16 %v1329, %v1329
          %v1362 = vpack.c.bf16 %v1330, %v1330
          %v1363 = vpack.c.bf16 %v1331, %v1331
          %v1364 = vpack.c.bf16 %v1332, %v1332
          %v1365 = vpack.c.bf16 %v1333, %v1333
          %v1366 = vpack.c.bf16 %v1334, %v1334
          %v1367 = vpack.c.bf16 %v1335, %v1335
          %v1368 = vpack.c.bf16 %v1336, %v1336
          %v1369 = vpack.c.bf16 %v1337, %v1337
          %v1370 = vpack.c.bf16 %v1338, %v1338
          %v1371 = vpack.c.bf16 %v1339, %v1339
          %v1372 = vpack.c.bf16 %v1340, %v1340
          %v1373 = vpack.c.bf16 %v1341, %v1341
          %v1374 = vpack.c.bf16 %v1342, %v1342
          %v1375 = vpack.c.bf16 %v1343, %v1343
          %v1376 = vpack.c.bf16 %v1344, %v1344
          %v1377 = vpack.c.bf16 %v1345, %v1345
          %v1378 = vpack.c.bf16 %v1346, %v1346
          %v1379 = vpack.c.bf16 %v1347, %v1347
          %v1380 = vpack.c.bf16 %v1348, %v1348
          %v1381 = vpack.c.bf16 %v1349, %v1349
          %v1382 = vpack.c.bf16 %v1350, %v1350
          %v1383 = vpack.c.bf16 %v1351, %v1351
          %v1384 = vpack.c.bf16 %v1352, %v1352
          %v1385 = vpack.c.bf16 %v1353, %v1353
          %v1386 = vpack.c.bf16 %v1354, %v1354
          %v1387 = vpack.c.bf16 %v1355, %v1355
          %v1388 = vpack.c.bf16 %v1356, %v1356
          %v1389 = vpack.c.bf16 %v1357, %v1357
          %v1390 = vpack.c.bf16 %v1358, %v1358
          %v1391 = vpack.c.bf16 %v1359, %v1359
          %1392 = vst [vmem:[%s271] sm:$0xf] %v1360
          %1393 = vst [vmem:[%s271 + $0x4] sm:$0xf] %v1361
          %1394 = vst [vmem:[%s271 + $0x8] sm:$0xf] %v1362
          %1395 = vst [vmem:[%s271 + $0xc] sm:$0xf] %v1363
          %1396 = vst [vmem:[%s271 + $0x10] sm:$0xf] %v1364
          %1397 = vst [vmem:[%s271 + $0x14] sm:$0xf] %v1365
          %1398 = vst [vmem:[%s271 + $0x18] sm:$0xf] %v1366
          %1399 = vst [vmem:[%s271 + $0x1c] sm:$0xf] %v1367
          %1400 = vst [vmem:[%s271 + $0x20] sm:$0xf] %v1368
          %1401 = vst [vmem:[%s271 + $0x24] sm:$0xf] %v1369
          %1402 = vst [vmem:[%s271 + $0x28] sm:$0xf] %v1370
          %1403 = vst [vmem:[%s271 + $0x2c] sm:$0xf] %v1371
          %1404 = vst [vmem:[%s271 + $0x30] sm:$0xf] %v1372
          %1405 = vst [vmem:[%s271 + $0x34] sm:$0xf] %v1373
          %1406 = vst [vmem:[%s271 + $0x38] sm:$0xf] %v1374
          %1407 = vst [vmem:[%s271 + $0x3c] sm:$0xf] %v1375
          %1408 = vst [vmem:[%s271 + $0x40] sm:$0xf] %v1376
          %1409 = vst [vmem:[%s271 + $0x44] sm:$0xf] %v1377
          %1410 = vst [vmem:[%s271 + $0x48] sm:$0xf] %v1378
          %1411 = vst [vmem:[%s271 + $0x4c] sm:$0xf] %v1379
          %1412 = vst [vmem:[%s271 + $0x50] sm:$0xf] %v1380
          %1413 = vst [vmem:[%s271 + $0x54] sm:$0xf] %v1381
          %1414 = vst [vmem:[%s271 + $0x58] sm:$0xf] %v1382
          %1415 = vst [vmem:[%s271 + $0x5c] sm:$0xf] %v1383
          %1416 = vst [vmem:[%s271 + $0x60] sm:$0xf] %v1384
          %1417 = vst [vmem:[%s271 + $0x64] sm:$0xf] %v1385
          %1418 = vst [vmem:[%s271 + $0x68] sm:$0xf] %v1386
          %1419 = vst [vmem:[%s271 + $0x6c] sm:$0xf] %v1387
          %1420 = vst [vmem:[%s271 + $0x70] sm:$0xf] %v1388
          %1421 = vst [vmem:[%s271 + $0x74] sm:$0xf] %v1389
          %1422 = vst [vmem:[%s271 + $0x78] sm:$0xf] %v1390
          %1423 = vst [vmem:[%s271 + $0x7c] sm:$0xf] %v1391
        $region44: #{tpu_custom_call.1} parent=35 // pred_fallthru
          _
        %s1424 = sand.u32 %s155, 1
        %s1425 = scalar_lea.sflag [#allocation4], %s1424
        %s1426 = sand.u32 %s155, 1
        %s1427 = smul.addr %s1426, 128
        %s1428 = scalar_lea.vmem [#allocation3], %s1427
        // Predicated region
        $region45: #{tpu_custom_call.1} parent=35 // pred_check
          %p1429 = pneg %p165
        $region46: #{tpu_custom_call.1} parent=35 // pred_check_branch
          %1431 = sbr.rel (%p1429) target = $region48
        $region47: #{tpu_custom_call.1} parent=35 // pred_region
          %s1432 = smul.u32 32, %s23
          %1434 = vsyncadd %s1425, 0
          %s1435 = sadd.s32 %s24, %s1432
          %s1436 = smul.addr %s1435, 4
          %s1437 = scalar_lea.hbm %s4, %s1436
          %s1438 = sshll.u32 %s1428, 4
          %s1439 = int_to_ptr.vmem [resolvable:$true] %s1438
          %s1440 = sshll.u32 %s1437, 4
          %s1441 = int_to_ptr.hbm [resolvable:$true] %s1440
          %1446 = dma.vmem_to_hbm [thread:$0]  %s1439, 2048, %s1441, %s1425, 64, 64, 4
        $region48: #{tpu_custom_call.1} parent=35 // pred_fallthru
          _
      $region36: #{tpu_custom_call.1} parent=5 // pred_fallthru
        _
      %p1447 = scmp.le.s32.totalorder 2, %s13
      // Predicated region
      $region49: #{tpu_custom_call.1} parent=5 // pred_check
        %p1448 = pneg %p1447
      $region50: #{tpu_custom_call.1} parent=5 // pred_check_branch
        %1450 = sbr.rel (%p1448) target = $region52
      $region51: #{tpu_custom_call.1} parent=5 // pred_region
        %s1451 = ssub.s32 %s13, 2
        // Predicated region
        $region53: #{tpu_custom_call.1} parent=51 // pred_check
          %p1452 = pneg %p171
        $region54: #{tpu_custom_call.1} parent=51 // pred_check_branch
          %1454 = sbr.rel (%p1452) target = $region56
        $region55: #{tpu_custom_call.1} parent=51 // pred_region
          %s1455 = sand.u32 %s156, 1
          %s1456 = scalar_lea.sflag [#allocation4], %s1455
          %s1457 = sand.u32 %s156, 1
          %s1458 = smul.addr %s1457, 128
          %s1459 = scalar_lea.vmem [#allocation3], %s1458
          %1461 = dma.done %s1456, 2048
        $region56: #{tpu_custom_call.1} parent=51 // pred_fallthru
          _
      $region52: #{tpu_custom_call.1} parent=5 // pred_fallthru
        _
    $region6: #{tpu_custom_call.1} parent=1 // loop_footer
      %s17 = sadd.s32 1, %s13
    $region7: #{tpu_custom_call.1} parent=1 // loop_footer_branch
      %12 = sbr.rel target = $region3
    $region8: #{tpu_custom_call.1} parent=1 // loop_exit
      _
    %1462 = vsyncpa [#allocation4], 1
    %s1463 = scalar_lea.sflag [#allocation4], 1
    %1464 = vsyncpa %s1463, 1

</llo_original>
